<compile_context>
chip_gen: v5e
topology: v5e:2x2
jax: 0.10.0
libtpu: 0.0.40
codegen_flags: <defaults>
</compile_context>

<pallas_src>
import math
import functools

import jax
import jax.numpy as jnp
from jax import lax
from jax.experimental import pallas as pl
from jax.experimental.pallas import tpu as pltpu


def _round_up(n, m):
    return ((n + m - 1) // m) * m


def self_attention_kernel(x_full_ref, x_tile_ref, wq_ref, bq_ref,
                          wkv_ref, bkv_ref, out_ref, attn_ref,
                          k_scratch, v_scratch, *, d_model, seq_len):
    """Grid = (batch b ['parallel'], query tile qi ['arbitrary', innermost]).

    x_full_ref: (1, Sp, Dp) bf16  whole (padded) sequence for batch element b
    x_tile_ref: (1, TQ, Dp) bf16  this step's query rows of x
    wq_ref:     (Dp, Dp)    bf16  Wq, (in, out) layout
    bq_ref:     (1, Dp)     f32
    wkv_ref:    (Dp, 2Dp)   bf16  fused [Wk | Wv]
    bkv_ref:    (1, 2Dp)    f32   fused [bk | bv]
    out_ref:    (1, TQ, Dp)       attention-output tile
    attn_ref:   (1, TQ, Sp)       attention-weights tile (last dim lane-dense)
    k/v_scratch:(Sp, Dp)    bf16  K / V, computed ONCE per batch element and
                                  reused by every q tile (qi is 'arbitrary').
    """
    qi = pl.program_id(1)
    Sp, Dp = k_scratch.shape

    # ---- once per batch element: project K and V for the whole sequence with
    #      a single fused MXU matmul (bf16 operands, f32 accumulation), then
    #      persist them as bf16 in VMEM scratch across all q tiles.  This
    #      removes the per-q-tile recomputation of the full (S, 3D) projection.
    @pl.when(qi == 0)
    def _():
        kv = jnp.dot(x_full_ref[0], wkv_ref[...],
                     preferred_element_type=jnp.float32)          # (Sp, 2Dp) f32
        kv = kv + bkv_ref[...]
        k_scratch[...] = kv[:, :Dp].astype(jnp.bfloat16)
        v_scratch[...] = kv[:, Dp:].astype(jnp.bfloat16)

    # ---- Q for this tile only (no (S, D) f32 staging roundtrip).  Scale is
    #      applied to q (TQ*D elements), not to the (TQ, S) scores.
    q = jnp.dot(x_tile_ref[0], wq_ref[...],
                preferred_element_type=jnp.float32)               # (TQ, Dp) f32
    q = (q + bq_ref[...]) * (1.0 / math.sqrt(d_model))
    q = q.astype(jnp.bfloat16)

    # ---- scores = q @ K^T: contract the feature dim of BOTH operands so this
    #      lowers to a single MXU op (trans_b form), no XLU transpose of K.
    scores = lax.dot_general(q, k_scratch[...],
                             dimension_numbers=(((1,), (1,)), ((), ())),
                             preferred_element_type=jnp.float32)  # (TQ, Sp) f32

    if seq_len != Sp:  # static: keep zero-padded key rows out of the softmax
        key_idx = lax.broadcasted_iota(jnp.int32, scores.shape, 1)
        scores = jnp.where(key_idx < seq_len, scores, jnp.float32(-1e30))

    # ---- numerically stable softmax kept in f32 (v5e VPU/EUP have no bf16).
    #      Exact divide (not approx reciprocal): the attention weights are a
    #      user-visible output and should sum to 1 per row.
    m = jnp.max(scores, axis=-1, keepdims=True)
    e = jnp.exp(scores - m)
    weights = e / jnp.sum(e, axis=-1, keepdims=True)

    # ---- attention output: bf16 MXU operands, f32 accumulation.
    out = jnp.dot(weights.astype(jnp.bfloat16), v_scratch[...],
                  preferred_element_type=jnp.float32)             # (TQ, Dp)

    out_ref[0] = out.astype(out_ref.dtype)
    attn_ref[0] = weights.astype(attn_ref.dtype)


def self_attention(x, wq, bq, wk, bk, wv, bv, *, tq=None):
    """x: (B, S, D). Weights w*: (D, D) in PyTorch (out, in) convention; b*: (D,)."""
    B, S, D = x.shape
    out_dtype = x.dtype

    # Pad S and D up to multiples of 128: unmasked lane-dense loads/stores and
    # full MXU tiles. Zero padding + softmax key-masking keeps the math exact
    # on the real S x D region (padded weight/bias entries are zero).
    Dp = _round_up(D, 128)
    Sp = _round_up(S, 128)

    # Query-tile size: 128 matches v5e's 128-wide MXU; 256 maps onto v6e/v7x's
    # 256x256 MXUs with fewer passes (sweep per generation via tq=).
    if tq is None:
        tq = 256 if (Sp % 256 == 0) else 128
    TQ = min(tq, Sp)
    assert Sp % TQ == 0
    num_q_tiles = Sp // TQ

    f32 = jnp.float32

    def pad2(a):  # (D, D) -> (Dp, Dp)
        return jnp.pad(a, ((0, Dp - a.shape[0]), (0, Dp - a.shape[1])))

    def pad1(a):  # (D,) -> (Dp,)
        return jnp.pad(a, ((0, Dp - a.shape[0]),))

    # PyTorch Linear computes x @ W.T + b -> keep weights in (in, out) layout.
    # Q projection stays separate (computed per tile); K/V are fused into one
    # wide (Dp, 2Dp) operand for a single once-per-batch MXU matmul.
    wq_p = pad2(wq.astype(f32).T).astype(jnp.bfloat16)                       # (Dp, Dp)
    wkv_p = jnp.concatenate([pad2(wk.astype(f32).T),
                             pad2(wv.astype(f32).T)], axis=1).astype(jnp.bfloat16)  # (Dp, 2Dp)
    bq_p = pad1(bq.astype(f32)).reshape(1, Dp)
    bkv_p = jnp.concatenate([pad1(bk.astype(f32)),
                             pad1(bv.astype(f32))]).reshape(1, 2 * Dp)

    # Cast x to bf16 BEFORE the DMA (halves HBM->VMEM traffic and the
    # double-buffered VMEM footprint; the kernel computes in bf16 anyway).
    x_p = jnp.pad(x, ((0, 0), (0, Sp - S), (0, Dp - D))).astype(jnp.bfloat16)

    # ---- VMEM budget: estimate the footprint and clamp to ~3/4 of physical
    #      VMEM (128 MiB on v5e/v6e, 64 MiB per core on v7x).
    osz = jnp.dtype(out_dtype).itemsize
    est_vmem = (
        2 * Sp * Dp * 2            # x full block (double-buffered, bf16)
        + 2 * TQ * Dp * 2          # x q-tile block
        + 2 * Dp * Dp * 2          # Wq (constant block index)
        + 2 * Dp * 2 * Dp * 2      # [Wk|Wv]
        + 2 * TQ * Dp * osz        # out block
        + 2 * TQ * Sp * osz        # attn block
        + 2 * Sp * Dp * 2          # K / V bf16 scratch
        + Sp * 2 * Dp * 4          # (Sp, 2Dp) f32 projection intermediate
        + 3 * TQ * Sp * 4          # scores / exp / weights f32 intermediates
    )
    phys_vmem = 128 * 1024 * 1024
    try:
        phys_vmem = int(pltpu.get_tpu_info().vmem_capacity_bytes)
    except Exception:
        pass  # fall back to v5e/v6e value
    vmem_limit = int(min(max(2 * est_vmem, 32 * 1024 * 1024), phys_vmem * 3 // 4))

    kernel = functools.partial(self_attention_kernel, d_model=D, seq_len=S)

    out_p, attn_p = pl.pallas_call(
        kernel,
        out_shape=(
            jax.ShapeDtypeStruct((B, Sp, Dp), out_dtype),
            # TODO(synk): for long sequences emit the weights in bf16 (or drop
            # them and use a flash-style K loop) to cut the O(S^2) writeback;
            # kept in x.dtype here to match the module's return semantics.
            jax.ShapeDtypeStruct((B, Sp, Sp), out_dtype),
        ),
        grid_spec=pltpu.PrefetchScalarGridSpec(
            num_scalar_prefetch=0,
            grid=(B, num_q_tiles),
            in_specs=[
                # full sequence: block index constant over qi -> DMA'd once per b
                pl.BlockSpec((1, Sp, Dp), lambda b, q: (b, 0, 0)),
                # this step's query rows of x (pipelined small tile)
                pl.BlockSpec((1, TQ, Dp), lambda b, q: (b, q, 0)),
                # weights / biases: constant block index -> DMA'd once.
                # (On v7x one could add pipeline_mode=pl.Buffered(1) to drop the
                # second buffer; omitted here for portability.)
                pl.BlockSpec((Dp, Dp), lambda b, q: (0, 0)),
                pl.BlockSpec((1, Dp), lambda b, q: (0, 0)),
                pl.BlockSpec((Dp, 2 * Dp), lambda b, q: (0, 0)),
                pl.BlockSpec((1, 2 * Dp), lambda b, q: (0, 0)),
            ],
            out_specs=[
                pl.BlockSpec((1, TQ, Dp), lambda b, q: (b, q, 0)),
                pl.BlockSpec((1, TQ, Sp), lambda b, q: (b, q, 0)),  # Sp % 128 == 0 -> lane-dense vst
            ],
            scratch_shapes=[
                pltpu.VMEM((Sp, Dp), jnp.bfloat16),  # K (persists across q tiles)
                pltpu.VMEM((Sp, Dp), jnp.bfloat16),  # V
            ],
        ),
        compiler_params=pltpu.CompilerParams(
            # batch is independent -> megacore-shards across TCs; the q-tile
            # axis MUST be 'arbitrary' (and innermost) so K/V scratch reuse is valid.
            dimension_semantics=("parallel", "arbitrary"),
            vmem_limit_bytes=vmem_limit,
        ),
    )(x_p, x_p, wq_p, bq_p, wkv_p, bkv_p)

    return out_p[:, :S, :D], attn_p[:, :S, :S]


def _init_linear(key, d_model):
    # Deterministic init mimicking torch.nn.Linear (uniform in +/- 1/sqrt(fan_in)).
    kw, kb = jax.random.split(key)
    bound = 1.0 / math.sqrt(d_model)
    w = jax.random.uniform(kw, (d_model, d_model), jnp.float32, -bound, bound)
    b = jax.random.uniform(kb, (d_model,), jnp.float32, -bound, bound)
    return w, b


if __name__ == "__main__":
    B, S, D = 2, 8, 32
    key = jax.random.PRNGKey(0)
    kx, kq, kk, kv = jax.random.split(key, 4)

    x = jax.random.normal(kx, (B, S, D), jnp.float32)
    wq, bq = _init_linear(kq, D)
    wk, bk = _init_linear(kk, D)
    wv, bv = _init_linear(kv, D)

    out, attn = self_attention(x, wq, bq, wk, bk, wv, bv)
    jax.block_until_ready((out, attn))

    # Pure-JAX f32 reference (kernel uses bf16 MXU operands, so tolerances are
    # loosened accordingly).
    def ref(x):
        Q = x @ wq.T + bq
        K = x @ wk.T + bk
        V = x @ wv.T + bv
        scores = (Q @ jnp.swapaxes(K, -2, -1)) / math.sqrt(D)
        w = jax.nn.softmax(scores, axis=-1)
        return w @ V, w

    ro, rw = ref(x)
    assert jnp.allclose(out, ro, atol=2e-2, rtol=2e-2), "output mismatch"
    assert jnp.allclose(attn, rw, atol=2e-2, rtol=2e-2), "attention weights mismatch"
    print("KERNEL_OK")
</pallas_src>

<mosaic_0001>
module attributes {stable_mosaic.version = 11 : i64} {
  func.func @self_attention_kernel(%arg0: i32, %arg1: i32, %arg2: memref<1x128x128xbf16, #tpu.memory_space<vmem>>, %arg3: memref<1x128x128xbf16, #tpu.memory_space<vmem>>, %arg4: memref<128x128xbf16, #tpu.memory_space<vmem>>, %arg5: memref<1x128xf32, #tpu.memory_space<vmem>>, %arg6: memref<128x256xbf16, #tpu.memory_space<vmem>>, %arg7: memref<1x256xf32, #tpu.memory_space<vmem>>, %arg8: memref<1x128x128xf32, #tpu.memory_space<vmem>>, %arg9: memref<1x128x128xf32, #tpu.memory_space<vmem>>, %arg10: memref<128x128xbf16, #tpu.memory_space<vmem>>, %arg11: memref<128x128xbf16, #tpu.memory_space<vmem>>) attributes {dimension_semantics = [#tpu.dimension_semantics<parallel>, #tpu.dimension_semantics<arbitrary>], iteration_bounds = array<i64: 2, 1>, scalar_prefetch = 0 : i64, scratch_operands = 2 : i64, tpu.core_type = #tpu.core_type<tc>, window_params = [{transform_indices = @transform_0, window_bounds = array<i64: 1, 128, 128>}, {transform_indices = @transform_1, window_bounds = array<i64: 1, 128, 128>}, {pipeline_mode = #tpu.pipeline_mode<synchronous>, transform_indices = @transform_2, window_bounds = array<i64: 128, 128>}, {pipeline_mode = #tpu.pipeline_mode<synchronous>, transform_indices = @transform_3, window_bounds = array<i64: 1, 128>}, {pipeline_mode = #tpu.pipeline_mode<synchronous>, transform_indices = @transform_4, window_bounds = array<i64: 128, 256>}, {pipeline_mode = #tpu.pipeline_mode<synchronous>, transform_indices = @transform_5, window_bounds = array<i64: 1, 256>}, {transform_indices = @transform_6, window_bounds = array<i64: 1, 128, 128>}, {transform_indices = @transform_7, window_bounds = array<i64: 1, 128, 128>}]} {
    %c0_i32 = arith.constant 0 : i32
    %0 = arith.cmpi eq, %arg1, %c0_i32 : i32
    %1 = arith.extui %0 : i1 to i32
    %c0_i32_0 = arith.constant 0 : i32
    %2 = arith.cmpi ne, %1, %c0_i32_0 : i32
    scf.if %2 {
      %c0_23 = arith.constant 0 : index
      %c0_24 = arith.constant 0 : index
      %c0_25 = arith.constant 0 : index
      %38 = vector.load %arg2[%c0_23, %c0_24, %c0_25] : memref<1x128x128xbf16, #tpu.memory_space<vmem>>, vector<1x128x128xbf16>
      %39 = vector.shape_cast %38 : vector<1x128x128xbf16> to vector<128x128xbf16>
      %c0_26 = arith.constant 0 : index
      %c0_27 = arith.constant 0 : index
      %40 = vector.load %arg6[%c0_26, %c0_27] : memref<128x256xbf16, #tpu.memory_space<vmem>>, vector<128x256xbf16>
      %cst_28 = arith.constant dense<0.000000e+00> : vector<128x256xf32>
      %41 = tpu.matmul %39, %40, %cst_28 {dimension_numbers = #tpu.dot_dimension_numbers<[1], [0], [0], [1], [0, 0, 1, 1], [], []>} : vector<128x128xbf16>, vector<128x256xbf16>, vector<128x256xf32> -> vector<128x256xf32>
      %c0_29 = arith.constant 0 : index
      %c0_30 = arith.constant 0 : index
      %42 = vector.load %arg7[%c0_29, %c0_30] : memref<1x256xf32, #tpu.memory_space<vmem>>, vector<1x256xf32>
      %43 = vector.broadcast %42 : vector<1x256xf32> to vector<128x256xf32>
      %44 = arith.addf %41, %43 : vector<128x256xf32>
      %45 = vector.extract_strided_slice %44 {offsets = [0, 0], sizes = [128, 128], strides = [1, 1]} : vector<128x256xf32> to vector<128x128xf32>
      %46 = arith.truncf %45 : vector<128x128xf32> to vector<128x128xbf16>
      %c0_31 = arith.constant 0 : index
      %c0_32 = arith.constant 0 : index
      %47 = vector.load %arg10[%c0_31, %c0_32] : memref<128x128xbf16, #tpu.memory_space<vmem>>, vector<128x128xbf16>
      tpu.vector_store %arg10[%c0_31, %c0_32], %46 {strides = array<i32>} : memref<128x128xbf16, #tpu.memory_space<vmem>>, vector<128x128xbf16>,
      %48 = vector.extract_strided_slice %44 {offsets = [0, 128], sizes = [128, 128], strides = [1, 1]} : vector<128x256xf32> to vector<128x128xf32>
      %49 = arith.truncf %48 : vector<128x128xf32> to vector<128x128xbf16>
      %c0_33 = arith.constant 0 : index
      %c0_34 = arith.constant 0 : index
      %50 = vector.load %arg11[%c0_33, %c0_34] : memref<128x128xbf16, #tpu.memory_space<vmem>>, vector<128x128xbf16>
      tpu.vector_store %arg11[%c0_33, %c0_34], %49 {strides = array<i32>} : memref<128x128xbf16, #tpu.memory_space<vmem>>, vector<128x128xbf16>,
    } else {
    }
    %c0 = arith.constant 0 : index
    %c0_1 = arith.constant 0 : index
    %c0_2 = arith.constant 0 : index
    %3 = vector.load %arg3[%c0, %c0_1, %c0_2] : memref<1x128x128xbf16, #tpu.memory_space<vmem>>, vector<1x128x128xbf16>
    %4 = vector.shape_cast %3 : vector<1x128x128xbf16> to vector<128x128xbf16>
    %c0_3 = arith.constant 0 : index
    %c0_4 = arith.constant 0 : index
    %5 = vector.load %arg4[%c0_3, %c0_4] : memref<128x128xbf16, #tpu.memory_space<vmem>>, vector<128x128xbf16>
    %cst = arith.constant dense<0.000000e+00> : vector<128x128xf32>
    %6 = tpu.matmul %4, %5, %cst {dimension_numbers = #tpu.dot_dimension_numbers<[1], [0], [0], [1], [0, 0, 1, 1], [], []>} : vector<128x128xbf16>, vector<128x128xbf16>, vector<128x128xf32> -> vector<128x128xf32>
    %c0_5 = arith.constant 0 : index
    %c0_6 = arith.constant 0 : index
    %7 = vector.load %arg5[%c0_5, %c0_6] : memref<1x128xf32, #tpu.memory_space<vmem>>, vector<1x128xf32>
    %8 = vector.broadcast %7 : vector<1x128xf32> to vector<128x128xf32>
    %9 = arith.addf %6, %8 : vector<128x128xf32>
    %cst_7 = arith.constant 0.176776692 : f32
    %10 = vector.broadcast %cst_7 : f32 to vector<128x128xf32>
    %11 = arith.mulf %9, %10 : vector<128x128xf32>
    %12 = arith.truncf %11 : vector<128x128xf32> to vector<128x128xbf16>
    %c0_8 = arith.constant 0 : index
    %c0_9 = arith.constant 0 : index
    %13 = vector.load %arg10[%c0_8, %c0_9] : memref<128x128xbf16, #tpu.memory_space<vmem>>, vector<128x128xbf16>
    %cst_10 = arith.constant dense<0.000000e+00> : vector<128x128xf32>
    %14 = tpu.matmul %12, %13, %cst_10 {dimension_numbers = #tpu.dot_dimension_numbers<[1], [1], [0], [0], [0, 0, 1, 0], [], []>} : vector<128x128xbf16>, vector<128x128xbf16>, vector<128x128xf32> -> vector<128x128xf32>
    %15 = tpu.iota {dimensions = array<i32: 1>} : vector<128x128xi32>
    %c8_i32 = arith.constant 8 : i32
    %16 = vector.broadcast %c8_i32 : i32 to vector<128x128xi32>
    %17 = arith.cmpi slt, %15, %16 : vector<128x128xi32>
    %cst_11 = arith.constant -1.000000e+30 : f32
    %18 = vector.broadcast %cst_11 : f32 to vector<128x128xf32>
    %19 = arith.select %17, %14, %18 : vector<128x128xi1>, vector<128x128xf32>
    %cst_12 = arith.constant dense<0xFF800000> : vector<128xf32>
    %20 = vector.multi_reduction <maximumf>, %19, %cst_12 [1] : vector<128x128xf32> to vector<128xf32>
    %21 = vector.shape_cast %20 : vector<128xf32> to vector<128x1xf32>
    %22 = vector.broadcast %21 : vector<128x1xf32> to vector<128x128xf32>
    %23 = arith.subf %19, %22 : vector<128x128xf32>
    %24 = math.exp %23 : vector<128x128xf32>
    %cst_13 = arith.constant dense<0.000000e+00> : vector<128xf32>
    %25 = vector.multi_reduction <add>, %24, %cst_13 [1] : vector<128x128xf32> to vector<128xf32>
    %26 = vector.shape_cast %25 : vector<128xf32> to vector<128x1xf32>
    %27 = vector.broadcast %26 : vector<128x1xf32> to vector<128x128xf32>
    %28 = arith.divf %24, %27 : vector<128x128xf32>
    %29 = arith.truncf %28 : vector<128x128xf32> to vector<128x128xbf16>
    %c0_14 = arith.constant 0 : index
    %c0_15 = arith.constant 0 : index
    %30 = vector.load %arg11[%c0_14, %c0_15] : memref<128x128xbf16, #tpu.memory_space<vmem>>, vector<128x128xbf16>
    %cst_16 = arith.constant dense<0.000000e+00> : vector<128x128xf32>
    %31 = tpu.matmul %29, %30, %cst_16 {dimension_numbers = #tpu.dot_dimension_numbers<[1], [0], [0], [1], [0, 0, 1, 1], [], []>} : vector<128x128xbf16>, vector<128x128xbf16>, vector<128x128xf32> -> vector<128x128xf32>
    %c0_17 = arith.constant 0 : index
    %c0_18 = arith.constant 0 : index
    %c0_19 = arith.constant 0 : index
    %32 = vector.load %arg8[%c0_17, %c0_18, %c0_19] : memref<1x128x128xf32, #tpu.memory_space<vmem>>, vector<1x128x128xf32>
    %33 = vector.shape_cast %32 : vector<1x128x128xf32> to vector<128x128xf32>
    %34 = vector.shape_cast %31 : vector<128x128xf32> to vector<1x128x128xf32>
    tpu.vector_store %arg8[%c0_17, %c0_18, %c0_19], %34 {strides = array<i32>} : memref<1x128x128xf32, #tpu.memory_space<vmem>>, vector<1x128x128xf32>,
    %c0_20 = arith.constant 0 : index
    %c0_21 = arith.constant 0 : index
    %c0_22 = arith.constant 0 : index
    %35 = vector.load %arg9[%c0_20, %c0_21, %c0_22] : memref<1x128x128xf32, #tpu.memory_space<vmem>>, vector<1x128x128xf32>
    %36 = vector.shape_cast %35 : vector<1x128x128xf32> to vector<128x128xf32>
    %37 = vector.shape_cast %28 : vector<128x128xf32> to vector<1x128x128xf32>
    tpu.vector_store %arg9[%c0_20, %c0_21, %c0_22], %37 {strides = array<i32>} : memref<1x128x128xf32, #tpu.memory_space<vmem>>, vector<1x128x128xf32>,
    return
  }
  func.func @transform_0(%arg0: i32, %arg1: i32) -> (i32, i32, i32) {
    %c0_i32 = arith.constant 0 : i32
    %c0_i32_0 = arith.constant 0 : i32
    %c0_i32_1 = arith.constant 0 : i32
    return %arg0, %c0_i32, %c0_i32_0 : i32, i32, i32
  }
  func.func @transform_1(%arg0: i32, %arg1: i32) -> (i32, i32, i32) {
    %c0_i32 = arith.constant 0 : i32
    %c0_i32_0 = arith.constant 0 : i32
    return %arg0, %arg1, %c0_i32 : i32, i32, i32
  }
  func.func @transform_2(%arg0: i32, %arg1: i32) -> (i32, i32) {
    %c0_i32 = arith.constant 0 : i32
    %c0_i32_0 = arith.constant 0 : i32
    %c0_i32_1 = arith.constant 0 : i32
    return %c0_i32, %c0_i32_0 : i32, i32
  }
  func.func @transform_3(%arg0: i32, %arg1: i32) -> (i32, i32) {
    %c0_i32 = arith.constant 0 : i32
    %c0_i32_0 = arith.constant 0 : i32
    %c0_i32_1 = arith.constant 0 : i32
    return %c0_i32, %c0_i32_0 : i32, i32
  }
  func.func @transform_4(%arg0: i32, %arg1: i32) -> (i32, i32) {
    %c0_i32 = arith.constant 0 : i32
    %c0_i32_0 = arith.constant 0 : i32
    %c0_i32_1 = arith.constant 0 : i32
    return %c0_i32, %c0_i32_0 : i32, i32
  }
  func.func @transform_5(%arg0: i32, %arg1: i32) -> (i32, i32) {
    %c0_i32 = arith.constant 0 : i32
    %c0_i32_0 = arith.constant 0 : i32
    %c0_i32_1 = arith.constant 0 : i32
    return %c0_i32, %c0_i32_0 : i32, i32
  }
  func.func @transform_6(%arg0: i32, %arg1: i32) -> (i32, i32, i32) {
    %c0_i32 = arith.constant 0 : i32
    %c0_i32_0 = arith.constant 0 : i32
    return %arg0, %arg1, %c0_i32 : i32, i32, i32
  }
  func.func @transform_7(%arg0: i32, %arg1: i32) -> (i32, i32, i32) {
    %c0_i32 = arith.constant 0 : i32
    %c0_i32_0 = arith.constant 0 : i32
    return %arg0, %arg1, %c0_i32 : i32, i32, i32
  }
}

</mosaic_0001>

<llo_original>
// kernel: tpu_custom_call.1
$region0: #{tpu_custom_call.1}
  #allocation0 [shape = 'u32[]', space=smem, size = 0x4, offset = 0x4, fixed_abs, tag = 'smem constant byte address 0x4 - core index']
  #allocation1 [shape = 'u32[72,128]{1,0:T(1,128)}', space=vmem, size = 0x9000, scoped, tag = 'internal scratch']
  #allocation2 [shape = 'bf16[128,128]{1,0:T(8,128)(2,1)}', space=vmem, size = 0x8000, scoped, tag = 'scratch operand']
  #allocation3 [shape = 'bf16[128,128]{1,0:T(8,128)(2,1)}', space=vmem, size = 0x8000, scoped, tag = 'scratch operand']
  %s0 = inlined_call_operand.hbm [shape: bf16[2,128,128], index: 0, kind: input, shape index: {}]
  %s1 = inlined_call_operand.hbm [shape: bf16[2,128,128], index: 1, kind: input, shape index: {}]
  %s2 = inlined_call_operand.hbm [shape: bf16[128,128], index: 2, kind: input, shape index: {}]
  %s3 = inlined_call_operand.vmem [shape: f32[1,128], index: 3, kind: input, shape index: {}]
  %s4 = inlined_call_operand.hbm [shape: bf16[128,256], index: 4, kind: input, shape index: {}]
  %s5 = inlined_call_operand.vmem [shape: f32[1,256], index: 5, kind: input, shape index: {}]
  %s6 = inlined_call_operand.hbm [shape: f32[2,128,128], index: 6, kind: output, shape index: {0}]
  %s7 = inlined_call_operand.hbm [shape: f32[2,128,128], index: 7, kind: output, shape index: {1}]
  %8 = xla_tuple %s6, %s7
  %s9 = sld [smem:[#allocation0]]
  $region85: #{tpu_custom_call.1} parent=0
    _
  %s11 = ssub.s32 1, %s9
  %s12 = scalar_select 0, %s11, %s9
  $region1: #{tpu_custom_call.1} parent=0
    #allocation4 [shape = 'u8[65536]{0}', space=vmem, size = 0x10000, scoped, tag = 'input window, operand 0']
    #allocation5 [shape = 's32[2]{0}', space=sflag, size = 0x8, scoped, tag = 'scoped memory for tpu_custom_call.1']
    #allocation6 [shape = 's32[2]{0}', space=sflag, size = 0x8, scoped, tag = 'scoped memory for tpu_custom_call.1']
    #allocation7 [shape = 'u8[65536]{0}', space=vmem, size = 0x10000, scoped, tag = 'input window, operand 1']
    #allocation8 [shape = 's32[2]{0}', space=sflag, size = 0x8, scoped, tag = 'scoped memory for tpu_custom_call.1']
    #allocation9 [shape = 'u8[32768]{0}', space=vmem, size = 0x8000, scoped, tag = 'input window, operand 2, single buffered']
    #allocation10 [shape = 'u8[65536]{0}', space=vmem, size = 0x10000, scoped, tag = 'input window, operand 4, single buffered']
    #allocation11 [shape = 's32[1]{0}', space=sflag, size = 0x4, scoped, tag = 'scoped memory for tpu_custom_call.1']
    #allocation12 [shape = 'u8[131072]{0}', space=vmem, size = 0x20000, scoped, tag = 'output window, operand 0']
    #allocation13 [shape = 'u8[131072]{0}', space=vmem, size = 0x20000, scoped, tag = 'output window, operand 1']
    #allocation14 [shape = 's32[2]{0}', space=sflag, size = 0x8, scoped, tag = 'scoped memory for tpu_custom_call.1']
    %13 = vsyncpa [#allocation5], 0
    %s14 = scalar_lea.sflag [#allocation5], 1
    %15 = vsyncpa %s14, 0
    %16 = vsyncpa [#allocation8], 0
    %s17 = scalar_lea.sflag [#allocation8], 1
    %18 = vsyncpa %s17, 0
    %19 = vsyncpa [#allocation11], 0
    %20 = vsyncpa [#allocation6], 0
    %s21 = scalar_lea.sflag [#allocation6], 1
    %22 = vsyncpa %s21, 0
    %23 = vsyncpa [#allocation14], 0
    %s24 = scalar_lea.sflag [#allocation14], 1
    %25 = vsyncpa %s24, 0
    loop: start=0, step=1, limit=4
    $region2: #{tpu_custom_call.1} parent=1 // loop_pre_header
      _
    $region3: #{tpu_custom_call.1} parent=1 // loop_header
      %s27 = sphi 0, %s31
      %p28 = scmp.ge.s32.totalorder %s27, 4
      %s34 = sphi 0, %s46
      %s35 = sphi 0, %s42
      %s36 = sphi 0, %s34
      %s37 = sphi 0, %s35
      %s38 = sphi 0, %s36
      %s39 = sphi 0, %s37
      %s49 = sphi 0, %s51
      %s52 = sphi 0, %s49
      %s53 = sphi 0, %s52
      %s69 = sphi 0, %s53
      %s77 = sphi 0, %s79
      %s80 = sphi 0, %s77
      %s81 = sphi 0, %s80
      %s97 = sphi 0, %s81
      %s101 = sphi 0, %s101
      %s103 = sphi 0, %s101
      %s104 = sphi 0, %s103
      %s118 = sphi 0, %s104
      %s122 = sphi 0, %s122
      %s124 = sphi 0, %s122
      %s125 = sphi 0, %s124
      %s139 = sphi 0, %s125
      %s143 = sphi 0, %s143
      %s145 = sphi 0, %s143
      %s146 = sphi 0, %s145
      %s160 = sphi 0, %s146
      %s164 = sphi 0, %s164
      %s166 = sphi 0, %s164
      %s167 = sphi 0, %s166
      %s181 = sphi 0, %s167
      %s189 = sphi 0, %s191
      %s192 = sphi 0, %s189
      %s193 = sphi 0, %s192
      %s209 = sphi 0, %s193
      %s217 = sphi 0, %s219
      %s220 = sphi 0, %s217
      %s221 = sphi 0, %s220
      %s237 = sphi 0, %s221
    $region4: #{tpu_custom_call.1} parent=1 // loop_header_branch
      %30 = sbr.rel (%p28) target = $region8
    $region5: #{tpu_custom_call.1} parent=1 // loop_body
      %s32 = ssub.s32 %s27, 1
      %s33 = ssub.s32 %s27, 2
      %s40 = sadd.s32 1, %s35
      %p41 = scmp.ge.s32.totalorder %s40, 1
      %s42 = scalar_select %p41, 0, %s40
      %s43 = sadd.s32 1, %s34
      %s44 = scalar_select %p41, %s43, %s34
      %p45 = scmp.ge.s32.totalorder %s44, 2
      %s46 = scalar_select %p45, 0, %s44
      %s47 = ssub.s32 %s34, %s46
      %p48 = scmp.eq.s32.totalorder %s47, 0
      %s50 = sadd.s32 %s49, 1
      %s51 = scalar_select %p48, %s49, %s50
      %p54 = pneg %p48
      %p55 = scmp.eq.s32.totalorder %s27, 1
      %p56 = por %p54, %p55
      %p57 = scmp.ne.s32.totalorder %s49, %s52
      %p58 = scmp.eq.s32.totalorder %s27, 0
      %p59 = por %p57, %p58
      %p60 = scmp.ne.s32.totalorder %s49, %s52
      %p61 = scmp.eq.s32.totalorder %s32, 1
      %p62 = por %p60, %p61
      %p63 = scmp.ne.s32.totalorder %s52, %s53
      %p64 = scmp.eq.s32.totalorder %s32, 0
      %p65 = por %p63, %p64
      %p66 = scmp.ne.s32.totalorder %s52, %s53
      %p67 = scmp.eq.s32.totalorder %s33, 1
      %p68 = por %p66, %p67
      %p70 = scmp.ne.s32.totalorder %s53, %s69
      %p71 = scmp.eq.s32.totalorder %s33, 0
      %p72 = por %p70, %p71
      %s73 = ssub.s32 %s34, %s46
      %s74 = ssub.s32 %s35, %s42
      %s75 = sor.u32 %s73, %s74
      %p76 = scmp.eq.s32.totalorder %s75, 0
      %s78 = sadd.s32 %s77, 1
      %s79 = scalar_select %p76, %s77, %s78
      %p82 = pneg %p76
      %p83 = scmp.eq.s32.totalorder %s27, 1
      %p84 = por %p82, %p83
      %p85 = scmp.ne.s32.totalorder %s77, %s80
      %p86 = scmp.eq.s32.totalorder %s27, 0
      %p87 = por %p85, %p86
      %p88 = scmp.ne.s32.totalorder %s77, %s80
      %p89 = scmp.eq.s32.totalorder %s32, 1
      %p90 = por %p88, %p89
      %p91 = scmp.ne.s32.totalorder %s80, %s81
      %p92 = scmp.eq.s32.totalorder %s32, 0
      %p93 = por %p91, %p92
      %p94 = scmp.ne.s32.totalorder %s80, %s81
      %p95 = scmp.eq.s32.totalorder %s33, 1
      %p96 = por %p94, %p95
      %p98 = scmp.ne.s32.totalorder %s81, %s97
      %p99 = scmp.eq.s32.totalorder %s33, 0
      %p100 = por %p98, %p99
      %s102 = sadd.s32 %s101, 1
      %p105 = scmp.eq.s32.totalorder %s27, 1
      %p106 = scmp.ne.s32.totalorder %s101, %s103
      %p107 = scmp.eq.s32.totalorder %s27, 0
      %p108 = por %p106, %p107
      %p109 = scmp.ne.s32.totalorder %s101, %s103
      %p110 = scmp.eq.s32.totalorder %s32, 1
      %p111 = por %p109, %p110
      %p112 = scmp.ne.s32.totalorder %s103, %s104
      %p113 = scmp.eq.s32.totalorder %s32, 0
      %p114 = por %p112, %p113
      %p115 = scmp.ne.s32.totalorder %s103, %s104
      %p116 = scmp.eq.s32.totalorder %s33, 1
      %p117 = por %p115, %p116
      %p119 = scmp.ne.s32.totalorder %s104, %s118
      %p120 = scmp.eq.s32.totalorder %s33, 0
      %p121 = por %p119, %p120
      %s123 = sadd.s32 %s122, 1
      %p126 = scmp.eq.s32.totalorder %s27, 1
      %p127 = scmp.ne.s32.totalorder %s122, %s124
      %p128 = scmp.eq.s32.totalorder %s27, 0
      %p129 = por %p127, %p128
      %p130 = scmp.ne.s32.totalorder %s122, %s124
      %p131 = scmp.eq.s32.totalorder %s32, 1
      %p132 = por %p130, %p131
      %p133 = scmp.ne.s32.totalorder %s124, %s125
      %p134 = scmp.eq.s32.totalorder %s32, 0
      %p135 = por %p133, %p134
      %p136 = scmp.ne.s32.totalorder %s124, %s125
      %p137 = scmp.eq.s32.totalorder %s33, 1
      %p138 = por %p136, %p137
      %p140 = scmp.ne.s32.totalorder %s125, %s139
      %p141 = scmp.eq.s32.totalorder %s33, 0
      %p142 = por %p140, %p141
      %s144 = sadd.s32 %s143, 1
      %p147 = scmp.eq.s32.totalorder %s27, 1
      %p148 = scmp.ne.s32.totalorder %s143, %s145
      %p149 = scmp.eq.s32.totalorder %s27, 0
      %p150 = por %p148, %p149
      %p151 = scmp.ne.s32.totalorder %s143, %s145
      %p152 = scmp.eq.s32.totalorder %s32, 1
      %p153 = por %p151, %p152
      %p154 = scmp.ne.s32.totalorder %s145, %s146
      %p155 = scmp.eq.s32.totalorder %s32, 0
      %p156 = por %p154, %p155
      %p157 = scmp.ne.s32.totalorder %s145, %s146
      %p158 = scmp.eq.s32.totalorder %s33, 1
      %p159 = por %p157, %p158
      %p161 = scmp.ne.s32.totalorder %s146, %s160
      %p162 = scmp.eq.s32.totalorder %s33, 0
      %p163 = por %p161, %p162
      %s165 = sadd.s32 %s164, 1
      %p168 = scmp.eq.s32.totalorder %s27, 1
      %p169 = scmp.ne.s32.totalorder %s164, %s166
      %p170 = scmp.eq.s32.totalorder %s27, 0
      %p171 = por %p169, %p170
      %p172 = scmp.ne.s32.totalorder %s164, %s166
      %p173 = scmp.eq.s32.totalorder %s32, 1
      %p174 = por %p172, %p173
      %p175 = scmp.ne.s32.totalorder %s166, %s167
      %p176 = scmp.eq.s32.totalorder %s32, 0
      %p177 = por %p175, %p176
      %p178 = scmp.ne.s32.totalorder %s166, %s167
      %p179 = scmp.eq.s32.totalorder %s33, 1
      %p180 = por %p178, %p179
      %p182 = scmp.ne.s32.totalorder %s167, %s181
      %p183 = scmp.eq.s32.totalorder %s33, 0
      %p184 = por %p182, %p183
      %s185 = ssub.s32 %s34, %s46
      %s186 = ssub.s32 %s35, %s42
      %s187 = sor.u32 %s185, %s186
      %p188 = scmp.eq.s32.totalorder %s187, 0
      %s190 = sadd.s32 %s189, 1
      %s191 = scalar_select %p188, %s189, %s190
      %p194 = pneg %p188
      %p195 = scmp.eq.s32.totalorder %s27, 1
      %p196 = por %p194, %p195
      %p197 = scmp.ne.s32.totalorder %s189, %s192
      %p198 = scmp.eq.s32.totalorder %s27, 0
      %p199 = por %p197, %p198
      %p200 = scmp.ne.s32.totalorder %s189, %s192
      %p201 = scmp.eq.s32.totalorder %s32, 1
      %p202 = por %p200, %p201
      %p203 = scmp.ne.s32.totalorder %s192, %s193
      %p204 = scmp.eq.s32.totalorder %s32, 0
      %p205 = por %p203, %p204
      %p206 = scmp.ne.s32.totalorder %s192, %s193
      %p207 = scmp.eq.s32.totalorder %s33, 1
      %p208 = por %p206, %p207
      %p210 = scmp.ne.s32.totalorder %s193, %s209
      %p211 = scmp.eq.s32.totalorder %s33, 0
      %p212 = por %p210, %p211
      %s213 = ssub.s32 %s34, %s46
      %s214 = ssub.s32 %s35, %s42
      %s215 = sor.u32 %s213, %s214
      %p216 = scmp.eq.s32.totalorder %s215, 0
      %s218 = sadd.s32 %s217, 1
      %s219 = scalar_select %p216, %s217, %s218
      %p222 = pneg %p216
      %p223 = scmp.eq.s32.totalorder %s27, 1
      %p224 = por %p222, %p223
      %p225 = scmp.ne.s32.totalorder %s217, %s220
      %p226 = scmp.eq.s32.totalorder %s27, 0
      %p227 = por %p225, %p226
      %p228 = scmp.ne.s32.totalorder %s217, %s220
      %p229 = scmp.eq.s32.totalorder %s32, 1
      %p230 = por %p228, %p229
      %p231 = scmp.ne.s32.totalorder %s220, %s221
      %p232 = scmp.eq.s32.totalorder %s32, 0
      %p233 = por %p231, %p232
      %p234 = scmp.ne.s32.totalorder %s220, %s221
      %p235 = scmp.eq.s32.totalorder %s33, 1
      %p236 = por %p234, %p235
      %p238 = scmp.ne.s32.totalorder %s221, %s237
      %p239 = scmp.eq.s32.totalorder %s33, 0
      %p240 = por %p238, %p239
      %p241 = scmp.le.s32.totalorder 1, %s27
      %p242 = scmp.lt.s32.totalorder %s27, 3
      %p243 = pnand %p241, %p242
      %p244 = pneg %p243
      // Predicated region
      $region9: #{tpu_custom_call.1} parent=5 // pred_check
        _
      $region10: #{tpu_custom_call.1} parent=5 // pred_check_branch
        %246 = sbr.rel (%p243) target = $region12
      $region11: #{tpu_custom_call.1} parent=5 // pred_region
        %s247 = ssub.s32 %s27, 1
        // Predicated region
        $region13: #{tpu_custom_call.1} parent=11 // pred_check
          %p248 = pneg %p114
        $region14: #{tpu_custom_call.1} parent=11 // pred_check_branch
          %250 = sbr.rel (%p248) target = $region16
        $region15: #{tpu_custom_call.1} parent=11 // pred_region
          %252 = vsyncadd [#allocation8], 0
          %s253 = sshll.u32 %s2, 4
          %s254 = int_to_ptr.hbm [resolvable:$true] %s253
          %s255 = sshll.u32 [#allocation9], 4
          %s256 = int_to_ptr.vmem [resolvable:$true] %s255
          %261 = dma.hbm_to_vmem [thread:$0]  %s254, 1024, %s256, [#allocation8], 64, 64, 4
        $region16: #{tpu_custom_call.1} parent=11 // pred_fallthru
          _
        // Predicated region
        $region17: #{tpu_custom_call.1} parent=11 // pred_check
          %p262 = pneg %p135
        $region18: #{tpu_custom_call.1} parent=11 // pred_check_branch
          %264 = sbr.rel (%p262) target = $region20
        $region19: #{tpu_custom_call.1} parent=11 // pred_region
          _
        $region20: #{tpu_custom_call.1} parent=11 // pred_fallthru
          _
        // Predicated region
        $region21: #{tpu_custom_call.1} parent=11 // pred_check
          %p265 = pneg %p156
        $region22: #{tpu_custom_call.1} parent=11 // pred_check_branch
          %267 = sbr.rel (%p265) target = $region24
        $region23: #{tpu_custom_call.1} parent=11 // pred_region
          %269 = vsyncadd [#allocation11], 0
          %s270 = sshll.u32 %s4, 4
          %s271 = int_to_ptr.hbm [resolvable:$true] %s270
          %s272 = sshll.u32 [#allocation10], 4
          %s273 = int_to_ptr.vmem [resolvable:$true] %s272
          %278 = dma.hbm_to_vmem [thread:$0]  %s271, 2048, %s273, [#allocation11], 128, 128, 8
        $region24: #{tpu_custom_call.1} parent=11 // pred_fallthru
          _
        // Predicated region
        $region25: #{tpu_custom_call.1} parent=11 // pred_check
          %p279 = pneg %p177
        $region26: #{tpu_custom_call.1} parent=11 // pred_check_branch
          %281 = sbr.rel (%p279) target = $region28
        $region27: #{tpu_custom_call.1} parent=11 // pred_region
          _
        $region28: #{tpu_custom_call.1} parent=11 // pred_fallthru
          _
      $region12: #{tpu_custom_call.1} parent=5 // pred_fallthru
        _
      %p282 = scmp.lt.s32.totalorder %s27, 2
      // Predicated region
      $region29: #{tpu_custom_call.1} parent=5 // pred_check
        %p283 = pneg %p282
      $region30: #{tpu_custom_call.1} parent=5 // pred_check_branch
        %285 = sbr.rel (%p283) target = $region32
      $region31: #{tpu_custom_call.1} parent=5 // pred_region
        // Predicated region
        $region33: #{tpu_custom_call.1} parent=31 // pred_check
          %p286 = pneg %p59
        $region34: #{tpu_custom_call.1} parent=31 // pred_check_branch
          %288 = sbr.rel (%p286) target = $region36
        $region35: #{tpu_custom_call.1} parent=31 // pred_region
          %s289 = sand.u32 %s49, 1
          %s290 = scalar_lea.sflag [#allocation5], %s289
          %s291 = sand.u32 %s49, 1
          %s292 = smul.addr %s291, 64
          %s293 = scalar_lea.vmem [#allocation4], %s292
          %295 = vsyncadd %s290, 0
          %s296 = smul.addr %s34, 16
          %s297 = smul.addr %s296, 4
          %s298 = scalar_lea.hbm %s0, %s297
          %s299 = sshll.u32 %s298, 4
          %s300 = int_to_ptr.hbm [resolvable:$true] %s299
          %s301 = sshll.u32 %s293, 4
          %s302 = int_to_ptr.vmem [resolvable:$true] %s301
          %307 = dma.hbm_to_vmem [thread:$0]  %s300, 1024, %s302, %s290, 64, 64, 4
        $region36: #{tpu_custom_call.1} parent=31 // pred_fallthru
          _
        // Predicated region
        $region37: #{tpu_custom_call.1} parent=31 // pred_check
          %p308 = pneg %p87
        $region38: #{tpu_custom_call.1} parent=31 // pred_check_branch
          %310 = sbr.rel (%p308) target = $region40
        $region39: #{tpu_custom_call.1} parent=31 // pred_region
          %s311 = sand.u32 %s27, 1
          %s312 = scalar_lea.sflag [#allocation8], %s311
          %s313 = sand.u32 %s77, 1
          %s314 = smul.addr %s313, 64
          %s315 = scalar_lea.vmem [#allocation7], %s314
          %s316 = smul.u32 16, %s35
          %318 = vsyncadd %s312, 0
          %s319 = smul.addr %s34, 16
          %s320 = sadd.s32 %s316, %s319
          %s321 = smul.addr %s320, 4
          %s322 = scalar_lea.hbm %s1, %s321
          %s323 = sshll.u32 %s322, 4
          %s324 = int_to_ptr.hbm [resolvable:$true] %s323
          %s325 = sshll.u32 %s315, 4
          %s326 = int_to_ptr.vmem [resolvable:$true] %s325
          %331 = dma.hbm_to_vmem [thread:$0]  %s324, 1024, %s326, %s312, 64, 64, 4
        $region40: #{tpu_custom_call.1} parent=31 // pred_fallthru
          _
      $region32: #{tpu_custom_call.1} parent=5 // pred_fallthru
        _
      %p332 = scmp.le.s32.totalorder 1, %s27
      %p333 = scmp.lt.s32.totalorder %s27, 3
      %p334 = pnand %p332, %p333
      %p335 = pneg %p334
      // Predicated region
      $region41: #{tpu_custom_call.1} parent=5 // pred_check
        _
      $region42: #{tpu_custom_call.1} parent=5 // pred_check_branch
        %337 = sbr.rel (%p334) target = $region44
      $region43: #{tpu_custom_call.1} parent=5 // pred_region
        %s338 = ssub.s32 %s27, 1
        %s339 = sand.u32 %s52, 1
        %s340 = scalar_lea.sflag [#allocation5], %s339
        %s341 = sand.u32 %s52, 1
        %s342 = smul.addr %s341, 64
        %s343 = scalar_lea.vmem [#allocation4], %s342
        // Predicated region
        $region45: #{tpu_custom_call.1} parent=43 // pred_check
          %p344 = pneg %p65
        $region46: #{tpu_custom_call.1} parent=43 // pred_check_branch
          %346 = sbr.rel (%p344) target = $region48
        $region47: #{tpu_custom_call.1} parent=43 // pred_region
          %348 = dma.done %s340, 1024
        $region48: #{tpu_custom_call.1} parent=43 // pred_fallthru
          _
        %s349 = sand.u32 %s32, 1
        %s350 = scalar_lea.sflag [#allocation8], %s349
        %s351 = sand.u32 %s80, 1
        %s352 = smul.addr %s351, 64
        %s353 = scalar_lea.vmem [#allocation7], %s352
        // Predicated region
        $region49: #{tpu_custom_call.1} parent=43 // pred_check
          %p354 = pneg %p93
        $region50: #{tpu_custom_call.1} parent=43 // pred_check_branch
          %356 = sbr.rel (%p354) target = $region52
        $region51: #{tpu_custom_call.1} parent=43 // pred_region
          %358 = dma.done %s350, 1024
        $region52: #{tpu_custom_call.1} parent=43 // pred_fallthru
          _
        // Predicated region
        $region53: #{tpu_custom_call.1} parent=43 // pred_check
          %p359 = pneg %p114
        $region54: #{tpu_custom_call.1} parent=43 // pred_check_branch
          %361 = sbr.rel (%p359) target = $region56
        $region55: #{tpu_custom_call.1} parent=43 // pred_region
          %363 = dma.done [#allocation8], 1024
        $region56: #{tpu_custom_call.1} parent=43 // pred_fallthru
          _
        // Predicated region
        $region57: #{tpu_custom_call.1} parent=43 // pred_check
          %p364 = pneg %p156
        $region58: #{tpu_custom_call.1} parent=43 // pred_check_branch
          %366 = sbr.rel (%p364) target = $region60
        $region59: #{tpu_custom_call.1} parent=43 // pred_region
          %368 = dma.done [#allocation11], 2048
        $region60: #{tpu_custom_call.1} parent=43 // pred_fallthru
          _
        %s369 = sand.u32 %s52, 1
        %s370 = scalar_lea.sflag [#allocation5], %s369
        %s371 = sand.u32 %s52, 1
        %s372 = smul.addr %s371, 64
        %s373 = scalar_lea.vmem [#allocation4], %s372
        %p374 = pneg %p65
        %p375 = pneg %p62
        %s376 = sand.u32 %s32, 1
        %s377 = scalar_lea.sflag [#allocation8], %s376
        %s378 = sand.u32 %s80, 1
        %s379 = smul.addr %s378, 64
        %s380 = scalar_lea.vmem [#allocation7], %s379
        %p381 = pneg %p93
        %p382 = pneg %p90
        %p383 = pneg %p114
        %p384 = pneg %p111
        %p385 = pneg %p135
        %p386 = pneg %p132
        %p387 = pneg %p156
        %p388 = pneg %p153
        %p389 = pneg %p177
        %p390 = pneg %p174
        %p391 = pneg %p205
        %p392 = pneg %p202
        %s393 = sand.u32 %s192, 1
        %s394 = scalar_lea.sflag [#allocation6], %s393
        %s395 = sand.u32 %s192, 1
        %s396 = smul.addr %s395, 128
        %s397 = scalar_lea.vmem [#allocation12], %s396
        %p398 = pneg %p233
        %p399 = pneg %p230
        %s400 = sand.u32 %s220, 1
        %s401 = scalar_lea.sflag [#allocation14], %s400
        %s402 = sand.u32 %s220, 1
        %s403 = smul.addr %s402, 128
        %s404 = scalar_lea.vmem [#allocation13], %s403
        %s405 = smul.u32 16, %s37
        %s406 = smul.u32 16, %s37
        %s407 = smul.u32 16, %s37
        %p408 = scmp.eq.s32.totalorder %s37, 0
        // Predicated region
        $region61: #{tpu_custom_call.1} parent=43 // pred_check
          %p409 = pneg %p408
        $region62: #{tpu_custom_call.1} parent=43 // pred_check_branch
          %411 = sbr.rel (%p409) target = $region64
        $region63: #{tpu_custom_call.1} parent=43 // pred_region
          %v412 = vld [vmem:[%s343] sm:$0xf]
          %v413 = vld [vmem:[%s343 + $0x4] sm:$0xf]
          %v414 = vld [vmem:[%s343 + $0x8] sm:$0xf]
          %v415 = vld [vmem:[%s343 + $0xc] sm:$0xf]
          %v416 = vld [vmem:[%s343 + $0x10] sm:$0xf]
          %v417 = vld [vmem:[%s343 + $0x14] sm:$0xf]
          %v418 = vld [vmem:[%s343 + $0x18] sm:$0xf]
          %v419 = vld [vmem:[%s343 + $0x1c] sm:$0xf]
          %v420 = vld [vmem:[%s343 + $0x20] sm:$0xf]
          %v421 = vld [vmem:[%s343 + $0x24] sm:$0xf]
          %v422 = vld [vmem:[%s343 + $0x28] sm:$0xf]
          %v423 = vld [vmem:[%s343 + $0x2c] sm:$0xf]
          %v424 = vld [vmem:[%s343 + $0x30] sm:$0xf]
          %v425 = vld [vmem:[%s343 + $0x34] sm:$0xf]
          %v426 = vld [vmem:[%s343 + $0x38] sm:$0xf]
          %v427 = vld [vmem:[%s343 + $0x3c] sm:$0xf]
          %v428 = vld [vmem:[#allocation10] sm:$0xff]
          %v429 = vld [vmem:[#allocation10 + $0x8] sm:$0xff]
          %v430 = vld [vmem:[#allocation10 + $0x10] sm:$0xff]
          %v431 = vld [vmem:[#allocation10 + $0x18] sm:$0xff]
          %v432 = vld [vmem:[#allocation10 + $0x20] sm:$0xff]
          %v433 = vld [vmem:[#allocation10 + $0x28] sm:$0xff]
          %v434 = vld [vmem:[#allocation10 + $0x30] sm:$0xff]
          %v435 = vld [vmem:[#allocation10 + $0x38] sm:$0xff]
          %v436 = vld [vmem:[#allocation10 + $0x40] sm:$0xff]
          %v437 = vld [vmem:[#allocation10 + $0x48] sm:$0xff]
          %v438 = vld [vmem:[#allocation10 + $0x50] sm:$0xff]
          %v439 = vld [vmem:[#allocation10 + $0x58] sm:$0xff]
          %v440 = vld [vmem:[#allocation10 + $0x60] sm:$0xff]
          %v441 = vld [vmem:[#allocation10 + $0x68] sm:$0xff]
          %v442 = vld [vmem:[#allocation10 + $0x70] sm:$0xff]
          %v443 = vld [vmem:[#allocation10 + $0x78] sm:$0xff]
          %v444 = vld [vmem:[%s5] sm:$0x3]
          %v446 = vperm.slane %v444, 0
          %v447 = vperm.slane %v444, 1
          %v466 = vunpack.c.l.b16 %v412
          %v467 = vunpack.c.l.b16 %v413
          %v468 = vunpack.c.l.b16 %v414
          %v469 = vunpack.c.l.b16 %v415
          %v470 = vunpack.c.l.b16 %v416
          %v471 = vunpack.c.l.b16 %v417
          %v472 = vunpack.c.l.b16 %v418
          %v473 = vunpack.c.l.b16 %v419
          %v474 = vunpack.c.l.b16 %v420
          %v475 = vunpack.c.l.b16 %v421
          %v476 = vunpack.c.l.b16 %v422
          %v477 = vunpack.c.l.b16 %v423
          %v478 = vunpack.c.l.b16 %v424
          %v479 = vunpack.c.l.b16 %v425
          %v480 = vunpack.c.l.b16 %v426
          %v481 = vunpack.c.l.b16 %v427
          %v482 = vpack.c.b16 %v467, %v466
          %v483 = vpack.c.b16 %v469, %v468
          %v484 = vpack.c.b16 %v471, %v470
          %v485 = vpack.c.b16 %v473, %v472
          %v486 = vpack.c.b16 %v475, %v474
          %v487 = vpack.c.b16 %v477, %v476
          %v488 = vpack.c.b16 %v479, %v478
          %v489 = vpack.c.b16 %v481, %v480
          %v514 = vunpack.c.l.b16 %v428
          %v515 = vunpack.c.h.b16 %v428
          %v516 = vunpack.c.l.b16 %v429
          %v517 = vunpack.c.h.b16 %v429
          %v518 = vunpack.c.l.b16 %v430
          %v519 = vunpack.c.h.b16 %v430
          %v520 = vunpack.c.l.b16 %v431
          %v521 = vunpack.c.h.b16 %v431
          %v522 = vunpack.c.l.b16 %v432
          %v523 = vunpack.c.h.b16 %v432
          %v524 = vunpack.c.l.b16 %v433
          %v525 = vunpack.c.h.b16 %v433
          %v526 = vunpack.c.l.b16 %v434
          %v527 = vunpack.c.h.b16 %v434
          %v528 = vunpack.c.l.b16 %v435
          %v529 = vunpack.c.h.b16 %v435
          %v530 = vunpack.c.l.b16 %v436
          %v531 = vunpack.c.h.b16 %v436
          %v532 = vunpack.c.l.b16 %v437
          %v533 = vunpack.c.h.b16 %v437
          %v534 = vunpack.c.l.b16 %v438
          %v535 = vunpack.c.h.b16 %v438
          %v536 = vunpack.c.l.b16 %v439
          %v537 = vunpack.c.h.b16 %v439
          %v538 = vunpack.c.l.b16 %v440
          %v539 = vunpack.c.h.b16 %v440
          %v540 = vunpack.c.l.b16 %v441
          %v541 = vunpack.c.h.b16 %v441
          %v542 = vunpack.c.l.b16 %v442
          %v543 = vunpack.c.h.b16 %v442
          %v544 = vunpack.c.l.b16 %v443
          %v545 = vunpack.c.h.b16 %v443
          %v546 = vpack.c.b16 %v516, %v514
          %v547 = vpack.c.b16 %v517, %v515
          %v548 = vpack.c.b16 %v520, %v518
          %v549 = vpack.c.b16 %v521, %v519
          %v550 = vpack.c.b16 %v524, %v522
          %v551 = vpack.c.b16 %v525, %v523
          %v552 = vpack.c.b16 %v528, %v526
          %v553 = vpack.c.b16 %v529, %v527
          %v554 = vpack.c.b16 %v532, %v530
          %v555 = vpack.c.b16 %v533, %v531
          %v556 = vpack.c.b16 %v536, %v534
          %v557 = vpack.c.b16 %v537, %v535
          %v558 = vpack.c.b16 %v540, %v538
          %v559 = vpack.c.b16 %v541, %v539
          %v560 = vpack.c.b16 %v544, %v542
          %v561 = vpack.c.b16 %v545, %v543
          %578 = vmatpush.bf16.msra.mxu0 %v560
          %579 = vmatpush.bf16.msra.mxu0 %v558
          %580 = vmatpush.bf16.msra.mxu0 %v556
          %581 = vmatpush.bf16.msra.mxu0 %v554
          %582 = vmatpush.bf16.msra.mxu0 %v552
          %583 = vmatpush.bf16.msra.mxu0 %v550
          %584 = vmatpush.bf16.msra.mxu0 %v548
          %585 = vmatpush.bf16.msra.mxu0 %v546
          %586 = vmatmul.bf16.gmra.mxu0 %v482
          %v587 = vpop.f32.mrf.mxu0
          %v588 = vadd.f32 %v446, %v587
          %v589 = vpop.f32.mrf.mxu0
          %v590 = vadd.f32 %v446, %v589
          %591 = vmatmul.bf16.gmra.mxu0 %v483
          %v592 = vpop.f32.mrf.mxu0
          %v593 = vadd.f32 %v446, %v592
          %v594 = vpop.f32.mrf.mxu0
          %v595 = vadd.f32 %v446, %v594
          %596 = vmatmul.bf16.gmra.mxu0 %v484
          %v597 = vpop.f32.mrf.mxu0
          %v598 = vadd.f32 %v446, %v597
          %v599 = vpop.f32.mrf.mxu0
          %v600 = vadd.f32 %v446, %v599
          %601 = vmatmul.bf16.gmra.mxu0 %v485
          %v602 = vpop.f32.mrf.mxu0
          %v603 = vadd.f32 %v446, %v602
          %v604 = vpop.f32.mrf.mxu0
          %v605 = vadd.f32 %v446, %v604
          %606 = vmatmul.bf16.gmra.mxu0 %v486
          %v607 = vpop.f32.mrf.mxu0
          %v608 = vadd.f32 %v446, %v607
          %v609 = vpop.f32.mrf.mxu0
          %v610 = vadd.f32 %v446, %v609
          %611 = vmatmul.bf16.gmra.mxu0 %v487
          %v612 = vpop.f32.mrf.mxu0
          %v613 = vadd.f32 %v446, %v612
          %v614 = vpop.f32.mrf.mxu0
          %v615 = vadd.f32 %v446, %v614
          %616 = vmatmul.bf16.gmra.mxu0 %v488
          %v617 = vpop.f32.mrf.mxu0
          %v618 = vadd.f32 %v446, %v617
          %v619 = vpop.f32.mrf.mxu0
          %v620 = vadd.f32 %v446, %v619
          %621 = vmatmul.bf16.gmra.mxu0 %v489
          %v622 = vpop.f32.mrf.mxu0
          %v623 = vadd.f32 %v446, %v622
          %v624 = vpop.f32.mrf.mxu0
          %v625 = vadd.f32 %v446, %v624
          %626 = vdwg.mxu0
          %627 = vmatpush.bf16.msra.mxu0 %v561
          %628 = vmatpush.bf16.msra.mxu0 %v559
          %629 = vmatpush.bf16.msra.mxu0 %v557
          %630 = vmatpush.bf16.msra.mxu0 %v555
          %631 = vmatpush.bf16.msra.mxu0 %v553
          %632 = vmatpush.bf16.msra.mxu0 %v551
          %633 = vmatpush.bf16.msra.mxu0 %v549
          %634 = vmatpush.bf16.msra.mxu0 %v547
          %635 = vmatmul.bf16.gmra.mxu0 %v482
          %v636 = vpop.f32.mrf.mxu0
          %v637 = vadd.f32 %v447, %v636
          %v638 = vpop.f32.mrf.mxu0
          %v639 = vadd.f32 %v447, %v638
          %640 = vmatmul.bf16.gmra.mxu0 %v483
          %v641 = vpop.f32.mrf.mxu0
          %v642 = vadd.f32 %v447, %v641
          %v643 = vpop.f32.mrf.mxu0
          %v644 = vadd.f32 %v447, %v643
          %645 = vmatmul.bf16.gmra.mxu0 %v484
          %v646 = vpop.f32.mrf.mxu0
          %v647 = vadd.f32 %v447, %v646
          %v648 = vpop.f32.mrf.mxu0
          %v649 = vadd.f32 %v447, %v648
          %650 = vmatmul.bf16.gmra.mxu0 %v485
          %v651 = vpop.f32.mrf.mxu0
          %v652 = vadd.f32 %v447, %v651
          %v653 = vpop.f32.mrf.mxu0
          %v654 = vadd.f32 %v447, %v653
          %655 = vmatmul.bf16.gmra.mxu0 %v486
          %v656 = vpop.f32.mrf.mxu0
          %v657 = vadd.f32 %v447, %v656
          %v658 = vpop.f32.mrf.mxu0
          %v659 = vadd.f32 %v447, %v658
          %660 = vmatmul.bf16.gmra.mxu0 %v487
          %v661 = vpop.f32.mrf.mxu0
          %v662 = vadd.f32 %v447, %v661
          %v663 = vpop.f32.mrf.mxu0
          %v664 = vadd.f32 %v447, %v663
          %665 = vmatmul.bf16.gmra.mxu0 %v488
          %v666 = vpop.f32.mrf.mxu0
          %v667 = vadd.f32 %v447, %v666
          %v668 = vpop.f32.mrf.mxu0
          %v669 = vadd.f32 %v447, %v668
          %670 = vmatmul.bf16.gmra.mxu0 %v489
          %v671 = vpop.f32.mrf.mxu0
          %v672 = vadd.f32 %v447, %v671
          %v673 = vpop.f32.mrf.mxu0
          %v674 = vadd.f32 %v447, %v673
          %675 = vdwg.mxu0
          %v676 = vpack.c.bf16 %v588, %v588
          %v677 = vpack.c.bf16 %v590, %v590
          %v678 = vpack.c.bf16 %v593, %v593
          %v679 = vpack.c.bf16 %v595, %v595
          %v680 = vpack.c.bf16 %v598, %v598
          %v681 = vpack.c.bf16 %v600, %v600
          %v682 = vpack.c.bf16 %v603, %v603
          %v683 = vpack.c.bf16 %v605, %v605
          %v684 = vpack.c.bf16 %v608, %v608
          %v685 = vpack.c.bf16 %v610, %v610
          %v686 = vpack.c.bf16 %v613, %v613
          %v687 = vpack.c.bf16 %v615, %v615
          %v688 = vpack.c.bf16 %v618, %v618
          %v689 = vpack.c.bf16 %v620, %v620
          %v690 = vpack.c.bf16 %v623, %v623
          %v691 = vpack.c.bf16 %v625, %v625
          %692 = vst [vmem:[#allocation2] sm:$0xf] %v676
          %693 = vst [vmem:[#allocation2 + $0x4] sm:$0xf] %v677
          %694 = vst [vmem:[#allocation2 + $0x8] sm:$0xf] %v678
          %695 = vst [vmem:[#allocation2 + $0xc] sm:$0xf] %v679
          %696 = vst [vmem:[#allocation2 + $0x10] sm:$0xf] %v680
          %697 = vst [vmem:[#allocation2 + $0x14] sm:$0xf] %v681
          %698 = vst [vmem:[#allocation2 + $0x18] sm:$0xf] %v682
          %699 = vst [vmem:[#allocation2 + $0x1c] sm:$0xf] %v683
          %700 = vst [vmem:[#allocation2 + $0x20] sm:$0xf] %v684
          %701 = vst [vmem:[#allocation2 + $0x24] sm:$0xf] %v685
          %702 = vst [vmem:[#allocation2 + $0x28] sm:$0xf] %v686
          %703 = vst [vmem:[#allocation2 + $0x2c] sm:$0xf] %v687
          %704 = vst [vmem:[#allocation2 + $0x30] sm:$0xf] %v688
          %705 = vst [vmem:[#allocation2 + $0x34] sm:$0xf] %v689
          %706 = vst [vmem:[#allocation2 + $0x38] sm:$0xf] %v690
          %707 = vst [vmem:[#allocation2 + $0x3c] sm:$0xf] %v691
          %v708 = vpack.c.bf16 %v637, %v637
          %v709 = vpack.c.bf16 %v639, %v639
          %v710 = vpack.c.bf16 %v642, %v642
          %v711 = vpack.c.bf16 %v644, %v644
          %v712 = vpack.c.bf16 %v647, %v647
          %v713 = vpack.c.bf16 %v649, %v649
          %v714 = vpack.c.bf16 %v652, %v652
          %v715 = vpack.c.bf16 %v654, %v654
          %v716 = vpack.c.bf16 %v657, %v657
          %v717 = vpack.c.bf16 %v659, %v659
          %v718 = vpack.c.bf16 %v662, %v662
          %v719 = vpack.c.bf16 %v664, %v664
          %v720 = vpack.c.bf16 %v667, %v667
          %v721 = vpack.c.bf16 %v669, %v669
          %v722 = vpack.c.bf16 %v672, %v672
          %v723 = vpack.c.bf16 %v674, %v674
          %724 = vst [vmem:[#allocation3] sm:$0xf] %v708
          %725 = vst [vmem:[#allocation3 + $0x4] sm:$0xf] %v709
          %726 = vst [vmem:[#allocation3 + $0x8] sm:$0xf] %v710
          %727 = vst [vmem:[#allocation3 + $0xc] sm:$0xf] %v711
          %728 = vst [vmem:[#allocation3 + $0x10] sm:$0xf] %v712
          %729 = vst [vmem:[#allocation3 + $0x14] sm:$0xf] %v713
          %730 = vst [vmem:[#allocation3 + $0x18] sm:$0xf] %v714
          %731 = vst [vmem:[#allocation3 + $0x1c] sm:$0xf] %v715
          %732 = vst [vmem:[#allocation3 + $0x20] sm:$0xf] %v716
          %733 = vst [vmem:[#allocation3 + $0x24] sm:$0xf] %v717
          %734 = vst [vmem:[#allocation3 + $0x28] sm:$0xf] %v718
          %735 = vst [vmem:[#allocation3 + $0x2c] sm:$0xf] %v719
          %736 = vst [vmem:[#allocation3 + $0x30] sm:$0xf] %v720
          %737 = vst [vmem:[#allocation3 + $0x34] sm:$0xf] %v721
          %738 = vst [vmem:[#allocation3 + $0x38] sm:$0xf] %v722
          %739 = vst [vmem:[#allocation3 + $0x3c] sm:$0xf] %v723
        $region64: #{tpu_custom_call.1} parent=43 // pred_fallthru
          _
        %v740 = vld [vmem:[%s353] sm:$0xf]
        %v741 = vld [vmem:[%s353 + $0x4] sm:$0xf]
        %v742 = vld [vmem:[%s353 + $0x8] sm:$0xf]
        %v743 = vld [vmem:[%s353 + $0xc] sm:$0xf]
        %v744 = vld [vmem:[%s353 + $0x10] sm:$0xf]
        %v745 = vld [vmem:[%s353 + $0x14] sm:$0xf]
        %v746 = vld [vmem:[%s353 + $0x18] sm:$0xf]
        %v747 = vld [vmem:[%s353 + $0x1c] sm:$0xf]
        %v748 = vld [vmem:[%s353 + $0x20] sm:$0xf]
        %v749 = vld [vmem:[%s353 + $0x24] sm:$0xf]
        %v750 = vld [vmem:[%s353 + $0x28] sm:$0xf]
        %v751 = vld [vmem:[%s353 + $0x2c] sm:$0xf]
        %v752 = vld [vmem:[%s353 + $0x30] sm:$0xf]
        %v753 = vld [vmem:[%s353 + $0x34] sm:$0xf]
        %v754 = vld [vmem:[%s353 + $0x38] sm:$0xf]
        %v755 = vld [vmem:[%s353 + $0x3c] sm:$0xf]
        %v756 = vld [vmem:[#allocation9] sm:$0xf]
        %v757 = vld [vmem:[#allocation9 + $0x4] sm:$0xf]
        %v758 = vld [vmem:[#allocation9 + $0x8] sm:$0xf]
        %v759 = vld [vmem:[#allocation9 + $0xc] sm:$0xf]
        %v760 = vld [vmem:[#allocation9 + $0x10] sm:$0xf]
        %v761 = vld [vmem:[#allocation9 + $0x14] sm:$0xf]
        %v762 = vld [vmem:[#allocation9 + $0x18] sm:$0xf]
        %v763 = vld [vmem:[#allocation9 + $0x1c] sm:$0xf]
        %v764 = vld [vmem:[#allocation9 + $0x20] sm:$0xf]
        %v765 = vld [vmem:[#allocation9 + $0x24] sm:$0xf]
        %v766 = vld [vmem:[#allocation9 + $0x28] sm:$0xf]
        %v767 = vld [vmem:[#allocation9 + $0x2c] sm:$0xf]
        %v768 = vld [vmem:[#allocation9 + $0x30] sm:$0xf]
        %v769 = vld [vmem:[#allocation9 + $0x34] sm:$0xf]
        %v770 = vld [vmem:[#allocation9 + $0x38] sm:$0xf]
        %v771 = vld [vmem:[#allocation9 + $0x3c] sm:$0xf]
        %v772 = vld [vmem:[%s3] sm:$0x1]
        %v774 = vperm.slane %v772, 0
        %v792 = vunpack.c.l.b16 %v740
        %v793 = vunpack.c.l.b16 %v741
        %v794 = vunpack.c.l.b16 %v742
        %v795 = vunpack.c.l.b16 %v743
        %v796 = vunpack.c.l.b16 %v744
        %v797 = vunpack.c.l.b16 %v745
        %v798 = vunpack.c.l.b16 %v746
        %v799 = vunpack.c.l.b16 %v747
        %v800 = vunpack.c.l.b16 %v748
        %v801 = vunpack.c.l.b16 %v749
        %v802 = vunpack.c.l.b16 %v750
        %v803 = vunpack.c.l.b16 %v751
        %v804 = vunpack.c.l.b16 %v752
        %v805 = vunpack.c.l.b16 %v753
        %v806 = vunpack.c.l.b16 %v754
        %v807 = vunpack.c.l.b16 %v755
        %v808 = vpack.c.b16 %v793, %v792
        %v809 = vpack.c.b16 %v795, %v794
        %v810 = vpack.c.b16 %v797, %v796
        %v811 = vpack.c.b16 %v799, %v798
        %v812 = vpack.c.b16 %v801, %v800
        %v813 = vpack.c.b16 %v803, %v802
        %v814 = vpack.c.b16 %v805, %v804
        %v815 = vpack.c.b16 %v807, %v806
        %v840 = vunpack.c.l.b16 %v756
        %v841 = vunpack.c.l.b16 %v757
        %v842 = vunpack.c.l.b16 %v758
        %v843 = vunpack.c.l.b16 %v759
        %v844 = vunpack.c.l.b16 %v760
        %v845 = vunpack.c.l.b16 %v761
        %v846 = vunpack.c.l.b16 %v762
        %v847 = vunpack.c.l.b16 %v763
        %v848 = vunpack.c.l.b16 %v764
        %v849 = vunpack.c.l.b16 %v765
        %v850 = vunpack.c.l.b16 %v766
        %v851 = vunpack.c.l.b16 %v767
        %v852 = vunpack.c.l.b16 %v768
        %v853 = vunpack.c.l.b16 %v769
        %v854 = vunpack.c.l.b16 %v770
        %v855 = vunpack.c.l.b16 %v771
        %v856 = vpack.c.b16 %v841, %v840
        %v857 = vpack.c.b16 %v843, %v842
        %v858 = vpack.c.b16 %v845, %v844
        %v859 = vpack.c.b16 %v847, %v846
        %v860 = vpack.c.b16 %v849, %v848
        %v861 = vpack.c.b16 %v851, %v850
        %v862 = vpack.c.b16 %v853, %v852
        %v863 = vpack.c.b16 %v855, %v854
        %872 = vmatpush.bf16.msra.mxu0 %v863
        %873 = vmatpush.bf16.msra.mxu0 %v862
        %874 = vmatpush.bf16.msra.mxu0 %v861
        %875 = vmatpush.bf16.msra.mxu0 %v860
        %876 = vmatpush.bf16.msra.mxu0 %v859
        %877 = vmatpush.bf16.msra.mxu0 %v858
        %878 = vmatpush.bf16.msra.mxu0 %v857
        %879 = vmatpush.bf16.msra.mxu0 %v856
        %880 = vmatmul.bf16.gmra.mxu0 %v808
        %v881 = vpop.f32.mrf.mxu0
        %v882 = vadd.f32 %v774, %v881
        %v883 = vpop.f32.mrf.mxu0
        %v884 = vadd.f32 %v774, %v883
        %885 = vmatmul.bf16.gmra.mxu0 %v809
        %v886 = vpop.f32.mrf.mxu0
        %v887 = vadd.f32 %v774, %v886
        %v888 = vpop.f32.mrf.mxu0
        %v889 = vadd.f32 %v774, %v888
        %890 = vmatmul.bf16.gmra.mxu0 %v810
        %v891 = vpop.f32.mrf.mxu0
        %v892 = vadd.f32 %v774, %v891
        %v893 = vpop.f32.mrf.mxu0
        %v894 = vadd.f32 %v774, %v893
        %895 = vmatmul.bf16.gmra.mxu0 %v811
        %v896 = vpop.f32.mrf.mxu0
        %v897 = vadd.f32 %v774, %v896
        %v898 = vpop.f32.mrf.mxu0
        %v899 = vadd.f32 %v774, %v898
        %900 = vmatmul.bf16.gmra.mxu0 %v812
        %v901 = vpop.f32.mrf.mxu0
        %v902 = vadd.f32 %v774, %v901
        %v903 = vpop.f32.mrf.mxu0
        %v904 = vadd.f32 %v774, %v903
        %905 = vmatmul.bf16.gmra.mxu0 %v813
        %v906 = vpop.f32.mrf.mxu0
        %v907 = vadd.f32 %v774, %v906
        %v908 = vpop.f32.mrf.mxu0
        %v909 = vadd.f32 %v774, %v908
        %910 = vmatmul.bf16.gmra.mxu0 %v814
        %v911 = vpop.f32.mrf.mxu0
        %v912 = vadd.f32 %v774, %v911
        %v913 = vpop.f32.mrf.mxu0
        %v914 = vadd.f32 %v774, %v913
        %915 = vmatmul.bf16.gmra.mxu0 %v815
        %v916 = vpop.f32.mrf.mxu0
        %v917 = vadd.f32 %v774, %v916
        %v918 = vpop.f32.mrf.mxu0
        %v919 = vadd.f32 %v774, %v918
        %920 = vdwg.mxu0
        %v921 = vmul.f32 %v882, 0.17677669
        %v922 = vmul.f32 %v884, 0.17677669
        %v923 = vmul.f32 %v887, 0.17677669
        %v924 = vmul.f32 %v889, 0.17677669
        %v925 = vmul.f32 %v892, 0.17677669
        %v926 = vmul.f32 %v894, 0.17677669
        %v927 = vmul.f32 %v897, 0.17677669
        %v928 = vmul.f32 %v899, 0.17677669
        %v929 = vmul.f32 %v902, 0.17677669
        %v930 = vmul.f32 %v904, 0.17677669
        %v931 = vmul.f32 %v907, 0.17677669
        %v932 = vmul.f32 %v909, 0.17677669
        %v933 = vmul.f32 %v912, 0.17677669
        %v934 = vmul.f32 %v914, 0.17677669
        %v935 = vmul.f32 %v917, 0.17677669
        %v936 = vmul.f32 %v919, 0.17677669
        %v937 = vpack.c.bf16 %v922, %v921
        %v938 = vpack.c.bf16 %v924, %v923
        %v939 = vpack.c.bf16 %v926, %v925
        %v940 = vpack.c.bf16 %v928, %v927
        %v941 = vpack.c.bf16 %v930, %v929
        %v942 = vpack.c.bf16 %v932, %v931
        %v943 = vpack.c.bf16 %v934, %v933
        %v944 = vpack.c.bf16 %v936, %v935
        %v945 = vld [vmem:[#allocation2] sm:$0xf]
        %v946 = vld [vmem:[#allocation2 + $0x4] sm:$0xf]
        %v947 = vld [vmem:[#allocation2 + $0x8] sm:$0xf]
        %v948 = vld [vmem:[#allocation2 + $0xc] sm:$0xf]
        %v949 = vld [vmem:[#allocation2 + $0x10] sm:$0xf]
        %v950 = vld [vmem:[#allocation2 + $0x14] sm:$0xf]
        %v951 = vld [vmem:[#allocation2 + $0x18] sm:$0xf]
        %v952 = vld [vmem:[#allocation2 + $0x1c] sm:$0xf]
        %v953 = vld [vmem:[#allocation2 + $0x20] sm:$0xf]
        %v954 = vld [vmem:[#allocation2 + $0x24] sm:$0xf]
        %v955 = vld [vmem:[#allocation2 + $0x28] sm:$0xf]
        %v956 = vld [vmem:[#allocation2 + $0x2c] sm:$0xf]
        %v957 = vld [vmem:[#allocation2 + $0x30] sm:$0xf]
        %v958 = vld [vmem:[#allocation2 + $0x34] sm:$0xf]
        %v959 = vld [vmem:[#allocation2 + $0x38] sm:$0xf]
        %v960 = vld [vmem:[#allocation2 + $0x3c] sm:$0xf]
        %v977 = vunpack.c.l.b16 %v945
        %v978 = vunpack.c.l.b16 %v946
        %v979 = vunpack.c.l.b16 %v947
        %v980 = vunpack.c.l.b16 %v948
        %v981 = vunpack.c.l.b16 %v949
        %v982 = vunpack.c.l.b16 %v950
        %v983 = vunpack.c.l.b16 %v951
        %v984 = vunpack.c.l.b16 %v952
        %v985 = vunpack.c.l.b16 %v953
        %v986 = vunpack.c.l.b16 %v954
        %v987 = vunpack.c.l.b16 %v955
        %v988 = vunpack.c.l.b16 %v956
        %v989 = vunpack.c.l.b16 %v957
        %v990 = vunpack.c.l.b16 %v958
        %v991 = vunpack.c.l.b16 %v959
        %v992 = vunpack.c.l.b16 %v960
        %v993 = vpack.c.b16 %v978, %v977
        %v994 = vpack.c.b16 %v980, %v979
        %v995 = vpack.c.b16 %v982, %v981
        %v996 = vpack.c.b16 %v984, %v983
        %v997 = vpack.c.b16 %v986, %v985
        %v998 = vpack.c.b16 %v988, %v987
        %v999 = vpack.c.b16 %v990, %v989
        %v1000 = vpack.c.b16 %v992, %v991
        %1009 = vmatpush.bf16.xpose.msra.mxu0 %v1000
        %1010 = vmatpush.bf16.xpose.msra.mxu0 %v999
        %1011 = vmatpush.bf16.xpose.msra.mxu0 %v998
        %1012 = vmatpush.bf16.xpose.msra.mxu0 %v997
        %1013 = vmatpush.bf16.xpose.msra.mxu0 %v996
        %1014 = vmatpush.bf16.xpose.msra.mxu0 %v995
        %1015 = vmatpush.bf16.xpose.msra.mxu0 %v994
        %1016 = vmatpush.bf16.xpose.msra.mxu0 %v993
        %1017 = vmatmul.bf16.gmra.mxu0 %v937
        %v1018 = vpop.f32.mrf.mxu0
        %v1019 = vadd.f32 0.0, %v1018
        %v1020 = vpop.f32.mrf.mxu0
        %v1021 = vadd.f32 0.0, %v1020
        %1022 = vmatmul.bf16.gmra.mxu0 %v938
        %v1023 = vpop.f32.mrf.mxu0
        %v1024 = vadd.f32 0.0, %v1023
        %v1025 = vpop.f32.mrf.mxu0
        %v1026 = vadd.f32 0.0, %v1025
        %1027 = vmatmul.bf16.gmra.mxu0 %v939
        %v1028 = vpop.f32.mrf.mxu0
        %v1029 = vadd.f32 0.0, %v1028
        %v1030 = vpop.f32.mrf.mxu0
        %v1031 = vadd.f32 0.0, %v1030
        %1032 = vmatmul.bf16.gmra.mxu0 %v940
        %v1033 = vpop.f32.mrf.mxu0
        %v1034 = vadd.f32 0.0, %v1033
        %v1035 = vpop.f32.mrf.mxu0
        %v1036 = vadd.f32 0.0, %v1035
        %1037 = vmatmul.bf16.gmra.mxu0 %v941
        %v1038 = vpop.f32.mrf.mxu0
        %v1039 = vadd.f32 0.0, %v1038
        %v1040 = vpop.f32.mrf.mxu0
        %v1041 = vadd.f32 0.0, %v1040
        %1042 = vmatmul.bf16.gmra.mxu0 %v942
        %v1043 = vpop.f32.mrf.mxu0
        %v1044 = vadd.f32 0.0, %v1043
        %v1045 = vpop.f32.mrf.mxu0
        %v1046 = vadd.f32 0.0, %v1045
        %1047 = vmatmul.bf16.gmra.mxu0 %v943
        %v1048 = vpop.f32.mrf.mxu0
        %v1049 = vadd.f32 0.0, %v1048
        %v1050 = vpop.f32.mrf.mxu0
        %v1051 = vadd.f32 0.0, %v1050
        %1052 = vmatmul.bf16.gmra.mxu0 %v944
        %v1053 = vpop.f32.mrf.mxu0
        %v1054 = vadd.f32 0.0, %v1053
        %v1055 = vpop.f32.mrf.mxu0
        %v1056 = vadd.f32 0.0, %v1055
        %1057 = vdwg.mxu0
        %v1058 = vlaneseq
        %v1059 = vand.u32 %v1058, 127
        %vm1060 = vcmp.lt.s32.totalorder %v1059, 8
        %v1061 = vsel %vm1060, %v1019, -1e+30
        %v1062 = vsel %vm1060, %v1021, -1e+30
        %v1063 = vsel %vm1060, %v1024, -1e+30
        %v1064 = vsel %vm1060, %v1026, -1e+30
        %v1065 = vsel %vm1060, %v1029, -1e+30
        %v1066 = vsel %vm1060, %v1031, -1e+30
        %v1067 = vsel %vm1060, %v1034, -1e+30
        %v1068 = vsel %vm1060, %v1036, -1e+30
        %v1069 = vsel %vm1060, %v1039, -1e+30
        %v1070 = vsel %vm1060, %v1041, -1e+30
        %v1071 = vsel %vm1060, %v1044, -1e+30
        %v1072 = vsel %vm1060, %v1046, -1e+30
        %v1073 = vsel %vm1060, %v1049, -1e+30
        %v1074 = vsel %vm1060, %v1051, -1e+30
        %v1075 = vsel %vm1060, %v1054, -1e+30
        %v1076 = vsel %vm1060, %v1056, -1e+30
        %1077 = vmax.xlane.f32.xlu0 %v1061
        %v1078 = vpop.xlane.xlu0 %1077
        %1079 = vmax.xlane.f32.xlu0 %v1062
        %v1080 = vpop.xlane.xlu0 %1079
        %1081 = vmax.xlane.f32.xlu0 %v1063
        %v1082 = vpop.xlane.xlu0 %1081
        %1083 = vmax.xlane.f32.xlu0 %v1064
        %v1084 = vpop.xlane.xlu0 %1083
        %1085 = vmax.xlane.f32.xlu0 %v1065
        %v1086 = vpop.xlane.xlu0 %1085
        %1087 = vmax.xlane.f32.xlu0 %v1066
        %v1088 = vpop.xlane.xlu0 %1087
        %1089 = vmax.xlane.f32.xlu0 %v1067
        %v1090 = vpop.xlane.xlu0 %1089
        %1091 = vmax.xlane.f32.xlu0 %v1068
        %v1092 = vpop.xlane.xlu0 %1091
        %1093 = vmax.xlane.f32.xlu0 %v1069
        %v1094 = vpop.xlane.xlu0 %1093
        %1095 = vmax.xlane.f32.xlu0 %v1070
        %v1096 = vpop.xlane.xlu0 %1095
        %1097 = vmax.xlane.f32.xlu0 %v1071
        %v1098 = vpop.xlane.xlu0 %1097
        %1099 = vmax.xlane.f32.xlu0 %v1072
        %v1100 = vpop.xlane.xlu0 %1099
        %1101 = vmax.xlane.f32.xlu0 %v1073
        %v1102 = vpop.xlane.xlu0 %1101
        %1103 = vmax.xlane.f32.xlu0 %v1074
        %v1104 = vpop.xlane.xlu0 %1103
        %1105 = vmax.xlane.f32.xlu0 %v1075
        %v1106 = vpop.xlane.xlu0 %1105
        %1107 = vmax.xlane.f32.xlu0 %v1076
        %v1108 = vpop.xlane.xlu0 %1107
        %v1109 = vsub.f32 %v1061, %v1078
        %v1110 = vsub.f32 %v1062, %v1080
        %v1111 = vsub.f32 %v1063, %v1082
        %v1112 = vsub.f32 %v1064, %v1084
        %v1113 = vsub.f32 %v1065, %v1086
        %v1114 = vsub.f32 %v1066, %v1088
        %v1115 = vsub.f32 %v1067, %v1090
        %v1116 = vsub.f32 %v1068, %v1092
        %v1117 = vsub.f32 %v1069, %v1094
        %v1118 = vsub.f32 %v1070, %v1096
        %v1119 = vsub.f32 %v1071, %v1098
        %v1120 = vsub.f32 %v1072, %v1100
        %v1121 = vsub.f32 %v1073, %v1102
        %v1122 = vsub.f32 %v1074, %v1104
        %v1123 = vsub.f32 %v1075, %v1106
        %v1124 = vsub.f32 %v1076, %v1108
        %v1125 = vmul.f32 %v1109, 1.442695
        %v1126 = vpow.pop %v1125
        %v1127 = vmul.f32 %v1110, 1.442695
        %v1128 = vpow.pop %v1127
        %v1129 = vmul.f32 %v1111, 1.442695
        %v1130 = vpow.pop %v1129
        %v1131 = vmul.f32 %v1112, 1.442695
        %v1132 = vpow.pop %v1131
        %v1133 = vmul.f32 %v1113, 1.442695
        %v1134 = vpow.pop %v1133
        %v1135 = vmul.f32 %v1114, 1.442695
        %v1136 = vpow.pop %v1135
        %v1137 = vmul.f32 %v1115, 1.442695
        %v1138 = vpow.pop %v1137
        %v1139 = vmul.f32 %v1116, 1.442695
        %v1140 = vpow.pop %v1139
        %v1141 = vmul.f32 %v1117, 1.442695
        %v1142 = vpow.pop %v1141
        %v1143 = vmul.f32 %v1118, 1.442695
        %v1144 = vpow.pop %v1143
        %v1145 = vmul.f32 %v1119, 1.442695
        %v1146 = vpow.pop %v1145
        %v1147 = vmul.f32 %v1120, 1.442695
        %v1148 = vpow.pop %v1147
        %v1149 = vmul.f32 %v1121, 1.442695
        %v1150 = vpow.pop %v1149
        %v1151 = vmul.f32 %v1122, 1.442695
        %v1152 = vpow.pop %v1151
        %v1153 = vmul.f32 %v1123, 1.442695
        %v1154 = vpow.pop %v1153
        %v1155 = vmul.f32 %v1124, 1.442695
        %v1156 = vpow.pop %v1155
        %1157 = vadd.xlane.f32.xlu0 %v1126
        %v1158 = vpop.xlane.xlu0 %1157
        %1159 = vadd.xlane.f32.xlu0 %v1128
        %v1160 = vpop.xlane.xlu0 %1159
        %1161 = vadd.xlane.f32.xlu0 %v1130
        %v1162 = vpop.xlane.xlu0 %1161
        %1163 = vadd.xlane.f32.xlu0 %v1132
        %v1164 = vpop.xlane.xlu0 %1163
        %1165 = vadd.xlane.f32.xlu0 %v1134
        %v1166 = vpop.xlane.xlu0 %1165
        %1167 = vadd.xlane.f32.xlu0 %v1136
        %v1168 = vpop.xlane.xlu0 %1167
        %1169 = vadd.xlane.f32.xlu0 %v1138
        %v1170 = vpop.xlane.xlu0 %1169
        %1171 = vadd.xlane.f32.xlu0 %v1140
        %v1172 = vpop.xlane.xlu0 %1171
        %1173 = vadd.xlane.f32.xlu0 %v1142
        %v1174 = vpop.xlane.xlu0 %1173
        %1175 = vadd.xlane.f32.xlu0 %v1144
        %v1176 = vpop.xlane.xlu0 %1175
        %1177 = vadd.xlane.f32.xlu0 %v1146
        %v1178 = vpop.xlane.xlu0 %1177
        %1179 = vadd.xlane.f32.xlu0 %v1148
        %v1180 = vpop.xlane.xlu0 %1179
        %1181 = vadd.xlane.f32.xlu0 %v1150
        %v1182 = vpop.xlane.xlu0 %1181
        %1183 = vadd.xlane.f32.xlu0 %v1152
        %v1184 = vpop.xlane.xlu0 %1183
        %1185 = vadd.xlane.f32.xlu0 %v1154
        %v1186 = vpop.xlane.xlu0 %1185
        %1187 = vadd.xlane.f32.xlu0 %v1156
        %v1188 = vpop.xlane.xlu0 %1187
        %v1189 = vrcp.pop %v1158
        %v1190 = vmul.f32 %v1158, %v1189
        %v1191 = vsub.f32 1.0, %v1190
        %v1192 = vmul.f32 %v1189, %v1191
        %v1193 = vadd.f32 %v1189, %v1192
        %vm1194 = vweird.f32 %v1158
        %vm1195 = vweird.f32 %v1189
        %vm1196 = vmor %vm1194, %vm1195
        %v1197 = vsel %vm1196, %v1189, %v1193
        %v1198 = vand.u32 2147483647, %v1158
        %vm1199 = vcmp.eq.f32.partialorder %v1198, 8.507059e+37
        %v1200 = vand.u32 %v1158, 2147483648
        %v1201 = vor.u32 1.1754944e-38, %v1200
        %v1202 = vsel %vm1199, %v1201, %v1197
        %v1203 = vmul.f32 %v1126, %v1202
        %v1204 = vrcp.pop %v1160
        %v1205 = vmul.f32 %v1160, %v1204
        %v1206 = vsub.f32 1.0, %v1205
        %v1207 = vmul.f32 %v1204, %v1206
        %v1208 = vadd.f32 %v1204, %v1207
        %vm1209 = vweird.f32 %v1160
        %vm1210 = vweird.f32 %v1204
        %vm1211 = vmor %vm1209, %vm1210
        %v1212 = vsel %vm1211, %v1204, %v1208
        %v1213 = vand.u32 2147483647, %v1160
        %vm1214 = vcmp.eq.f32.partialorder %v1213, 8.507059e+37
        %v1215 = vand.u32 %v1160, 2147483648
        %v1216 = vor.u32 1.1754944e-38, %v1215
        %v1217 = vsel %vm1214, %v1216, %v1212
        %v1218 = vmul.f32 %v1128, %v1217
        %v1219 = vrcp.pop %v1162
        %v1220 = vmul.f32 %v1162, %v1219
        %v1221 = vsub.f32 1.0, %v1220
        %v1222 = vmul.f32 %v1219, %v1221
        %v1223 = vadd.f32 %v1219, %v1222
        %vm1224 = vweird.f32 %v1162
        %vm1225 = vweird.f32 %v1219
        %vm1226 = vmor %vm1224, %vm1225
        %v1227 = vsel %vm1226, %v1219, %v1223
        %v1228 = vand.u32 2147483647, %v1162
        %vm1229 = vcmp.eq.f32.partialorder %v1228, 8.507059e+37
        %v1230 = vand.u32 %v1162, 2147483648
        %v1231 = vor.u32 1.1754944e-38, %v1230
        %v1232 = vsel %vm1229, %v1231, %v1227
        %v1233 = vmul.f32 %v1130, %v1232
        %v1234 = vrcp.pop %v1164
        %v1235 = vmul.f32 %v1164, %v1234
        %v1236 = vsub.f32 1.0, %v1235
        %v1237 = vmul.f32 %v1234, %v1236
        %v1238 = vadd.f32 %v1234, %v1237
        %vm1239 = vweird.f32 %v1164
        %vm1240 = vweird.f32 %v1234
        %vm1241 = vmor %vm1239, %vm1240
        %v1242 = vsel %vm1241, %v1234, %v1238
        %v1243 = vand.u32 2147483647, %v1164
        %vm1244 = vcmp.eq.f32.partialorder %v1243, 8.507059e+37
        %v1245 = vand.u32 %v1164, 2147483648
        %v1246 = vor.u32 1.1754944e-38, %v1245
        %v1247 = vsel %vm1244, %v1246, %v1242
        %v1248 = vmul.f32 %v1132, %v1247
        %v1249 = vrcp.pop %v1166
        %v1250 = vmul.f32 %v1166, %v1249
        %v1251 = vsub.f32 1.0, %v1250
        %v1252 = vmul.f32 %v1249, %v1251
        %v1253 = vadd.f32 %v1249, %v1252
        %vm1254 = vweird.f32 %v1166
        %vm1255 = vweird.f32 %v1249
        %vm1256 = vmor %vm1254, %vm1255
        %v1257 = vsel %vm1256, %v1249, %v1253
        %v1258 = vand.u32 2147483647, %v1166
        %vm1259 = vcmp.eq.f32.partialorder %v1258, 8.507059e+37
        %v1260 = vand.u32 %v1166, 2147483648
        %v1261 = vor.u32 1.1754944e-38, %v1260
        %v1262 = vsel %vm1259, %v1261, %v1257
        %v1263 = vmul.f32 %v1134, %v1262
        %v1264 = vrcp.pop %v1168
        %v1265 = vmul.f32 %v1168, %v1264
        %v1266 = vsub.f32 1.0, %v1265
        %v1267 = vmul.f32 %v1264, %v1266
        %v1268 = vadd.f32 %v1264, %v1267
        %vm1269 = vweird.f32 %v1168
        %vm1270 = vweird.f32 %v1264
        %vm1271 = vmor %vm1269, %vm1270
        %v1272 = vsel %vm1271, %v1264, %v1268
        %v1273 = vand.u32 2147483647, %v1168
        %vm1274 = vcmp.eq.f32.partialorder %v1273, 8.507059e+37
        %v1275 = vand.u32 %v1168, 2147483648
        %v1276 = vor.u32 1.1754944e-38, %v1275
        %v1277 = vsel %vm1274, %v1276, %v1272
        %v1278 = vmul.f32 %v1136, %v1277
        %v1279 = vrcp.pop %v1170
        %v1280 = vmul.f32 %v1170, %v1279
        %v1281 = vsub.f32 1.0, %v1280
        %v1282 = vmul.f32 %v1279, %v1281
        %v1283 = vadd.f32 %v1279, %v1282
        %vm1284 = vweird.f32 %v1170
        %vm1285 = vweird.f32 %v1279
        %vm1286 = vmor %vm1284, %vm1285
        %v1287 = vsel %vm1286, %v1279, %v1283
        %v1288 = vand.u32 2147483647, %v1170
        %vm1289 = vcmp.eq.f32.partialorder %v1288, 8.507059e+37
        %v1290 = vand.u32 %v1170, 2147483648
        %v1291 = vor.u32 1.1754944e-38, %v1290
        %v1292 = vsel %vm1289, %v1291, %v1287
        %v1293 = vmul.f32 %v1138, %v1292
        %v1294 = vrcp.pop %v1172
        %v1295 = vmul.f32 %v1172, %v1294
        %v1296 = vsub.f32 1.0, %v1295
        %v1297 = vmul.f32 %v1294, %v1296
        %v1298 = vadd.f32 %v1294, %v1297
        %vm1299 = vweird.f32 %v1172
        %vm1300 = vweird.f32 %v1294
        %vm1301 = vmor %vm1299, %vm1300
        %v1302 = vsel %vm1301, %v1294, %v1298
        %v1303 = vand.u32 2147483647, %v1172
        %vm1304 = vcmp.eq.f32.partialorder %v1303, 8.507059e+37
        %v1305 = vand.u32 %v1172, 2147483648
        %v1306 = vor.u32 1.1754944e-38, %v1305
        %v1307 = vsel %vm1304, %v1306, %v1302
        %v1308 = vmul.f32 %v1140, %v1307
        %v1309 = vrcp.pop %v1174
        %v1310 = vmul.f32 %v1174, %v1309
        %v1311 = vsub.f32 1.0, %v1310
        %v1312 = vmul.f32 %v1309, %v1311
        %v1313 = vadd.f32 %v1309, %v1312
        %vm1314 = vweird.f32 %v1174
        %vm1315 = vweird.f32 %v1309
        %vm1316 = vmor %vm1314, %vm1315
        %v1317 = vsel %vm1316, %v1309, %v1313
        %v1318 = vand.u32 2147483647, %v1174
        %vm1319 = vcmp.eq.f32.partialorder %v1318, 8.507059e+37
        %v1320 = vand.u32 %v1174, 2147483648
        %v1321 = vor.u32 1.1754944e-38, %v1320
        %v1322 = vsel %vm1319, %v1321, %v1317
        %v1323 = vmul.f32 %v1142, %v1322
        %v1324 = vrcp.pop %v1176
        %v1325 = vmul.f32 %v1176, %v1324
        %v1326 = vsub.f32 1.0, %v1325
        %v1327 = vmul.f32 %v1324, %v1326
        %v1328 = vadd.f32 %v1324, %v1327
        %vm1329 = vweird.f32 %v1176
        %vm1330 = vweird.f32 %v1324
        %vm1331 = vmor %vm1329, %vm1330
        %v1332 = vsel %vm1331, %v1324, %v1328
        %v1333 = vand.u32 2147483647, %v1176
        %vm1334 = vcmp.eq.f32.partialorder %v1333, 8.507059e+37
        %v1335 = vand.u32 %v1176, 2147483648
        %v1336 = vor.u32 1.1754944e-38, %v1335
        %v1337 = vsel %vm1334, %v1336, %v1332
        %v1338 = vmul.f32 %v1144, %v1337
        %v1339 = vrcp.pop %v1178
        %v1340 = vmul.f32 %v1178, %v1339
        %v1341 = vsub.f32 1.0, %v1340
        %v1342 = vmul.f32 %v1339, %v1341
        %v1343 = vadd.f32 %v1339, %v1342
        %vm1344 = vweird.f32 %v1178
        %vm1345 = vweird.f32 %v1339
        %vm1346 = vmor %vm1344, %vm1345
        %v1347 = vsel %vm1346, %v1339, %v1343
        %v1348 = vand.u32 2147483647, %v1178
        %vm1349 = vcmp.eq.f32.partialorder %v1348, 8.507059e+37
        %v1350 = vand.u32 %v1178, 2147483648
        %v1351 = vor.u32 1.1754944e-38, %v1350
        %v1352 = vsel %vm1349, %v1351, %v1347
        %v1353 = vmul.f32 %v1146, %v1352
        %v1354 = vrcp.pop %v1180
        %v1355 = vmul.f32 %v1180, %v1354
        %v1356 = vsub.f32 1.0, %v1355
        %v1357 = vmul.f32 %v1354, %v1356
        %v1358 = vadd.f32 %v1354, %v1357
        %vm1359 = vweird.f32 %v1180
        %vm1360 = vweird.f32 %v1354
        %vm1361 = vmor %vm1359, %vm1360
        %v1362 = vsel %vm1361, %v1354, %v1358
        %v1363 = vand.u32 2147483647, %v1180
        %vm1364 = vcmp.eq.f32.partialorder %v1363, 8.507059e+37
        %v1365 = vand.u32 %v1180, 2147483648
        %v1366 = vor.u32 1.1754944e-38, %v1365
        %v1367 = vsel %vm1364, %v1366, %v1362
        %v1368 = vmul.f32 %v1148, %v1367
        %v1369 = vrcp.pop %v1182
        %v1370 = vmul.f32 %v1182, %v1369
        %v1371 = vsub.f32 1.0, %v1370
        %v1372 = vmul.f32 %v1369, %v1371
        %v1373 = vadd.f32 %v1369, %v1372
        %vm1374 = vweird.f32 %v1182
        %vm1375 = vweird.f32 %v1369
        %vm1376 = vmor %vm1374, %vm1375
        %v1377 = vsel %vm1376, %v1369, %v1373
        %v1378 = vand.u32 2147483647, %v1182
        %vm1379 = vcmp.eq.f32.partialorder %v1378, 8.507059e+37
        %v1380 = vand.u32 %v1182, 2147483648
        %v1381 = vor.u32 1.1754944e-38, %v1380
        %v1382 = vsel %vm1379, %v1381, %v1377
        %v1383 = vmul.f32 %v1150, %v1382
        %v1384 = vrcp.pop %v1184
        %v1385 = vmul.f32 %v1184, %v1384
        %v1386 = vsub.f32 1.0, %v1385
        %v1387 = vmul.f32 %v1384, %v1386
        %v1388 = vadd.f32 %v1384, %v1387
        %vm1389 = vweird.f32 %v1184
        %vm1390 = vweird.f32 %v1384
        %vm1391 = vmor %vm1389, %vm1390
        %v1392 = vsel %vm1391, %v1384, %v1388
        %v1393 = vand.u32 2147483647, %v1184
        %vm1394 = vcmp.eq.f32.partialorder %v1393, 8.507059e+37
        %v1395 = vand.u32 %v1184, 2147483648
        %v1396 = vor.u32 1.1754944e-38, %v1395
        %v1397 = vsel %vm1394, %v1396, %v1392
        %v1398 = vmul.f32 %v1152, %v1397
        %v1399 = vrcp.pop %v1186
        %v1400 = vmul.f32 %v1186, %v1399
        %v1401 = vsub.f32 1.0, %v1400
        %v1402 = vmul.f32 %v1399, %v1401
        %v1403 = vadd.f32 %v1399, %v1402
        %vm1404 = vweird.f32 %v1186
        %vm1405 = vweird.f32 %v1399
        %vm1406 = vmor %vm1404, %vm1405
        %v1407 = vsel %vm1406, %v1399, %v1403
        %v1408 = vand.u32 2147483647, %v1186
        %vm1409 = vcmp.eq.f32.partialorder %v1408, 8.507059e+37
        %v1410 = vand.u32 %v1186, 2147483648
        %v1411 = vor.u32 1.1754944e-38, %v1410
        %v1412 = vsel %vm1409, %v1411, %v1407
        %v1413 = vmul.f32 %v1154, %v1412
        %v1414 = vrcp.pop %v1188
        %v1415 = vmul.f32 %v1188, %v1414
        %v1416 = vsub.f32 1.0, %v1415
        %v1417 = vmul.f32 %v1414, %v1416
        %v1418 = vadd.f32 %v1414, %v1417
        %vm1419 = vweird.f32 %v1188
        %vm1420 = vweird.f32 %v1414
        %vm1421 = vmor %vm1419, %vm1420
        %v1422 = vsel %vm1421, %v1414, %v1418
        %v1423 = vand.u32 2147483647, %v1188
        %vm1424 = vcmp.eq.f32.partialorder %v1423, 8.507059e+37
        %v1425 = vand.u32 %v1188, 2147483648
        %v1426 = vor.u32 1.1754944e-38, %v1425
        %v1427 = vsel %vm1424, %v1426, %v1422
        %v1428 = vmul.f32 %v1156, %v1427
        %v1429 = vpack.c.bf16 %v1218, %v1203
        %v1430 = vpack.c.bf16 %v1248, %v1233
        %v1431 = vpack.c.bf16 %v1278, %v1263
        %v1432 = vpack.c.bf16 %v1308, %v1293
        %v1433 = vpack.c.bf16 %v1338, %v1323
        %v1434 = vpack.c.bf16 %v1368, %v1353
        %v1435 = vpack.c.bf16 %v1398, %v1383
        %v1436 = vpack.c.bf16 %v1428, %v1413
        %v1437 = vld [vmem:[#allocation3] sm:$0xf]
        %v1438 = vld [vmem:[#allocation3 + $0x4] sm:$0xf]
        %v1439 = vld [vmem:[#allocation3 + $0x8] sm:$0xf]
        %v1440 = vld [vmem:[#allocation3 + $0xc] sm:$0xf]
        %v1441 = vld [vmem:[#allocation3 + $0x10] sm:$0xf]
        %v1442 = vld [vmem:[#allocation3 + $0x14] sm:$0xf]
        %v1443 = vld [vmem:[#allocation3 + $0x18] sm:$0xf]
        %v1444 = vld [vmem:[#allocation3 + $0x1c] sm:$0xf]
        %v1445 = vld [vmem:[#allocation3 + $0x20] sm:$0xf]
        %v1446 = vld [vmem:[#allocation3 + $0x24] sm:$0xf]
        %v1447 = vld [vmem:[#allocation3 + $0x28] sm:$0xf]
        %v1448 = vld [vmem:[#allocation3 + $0x2c] sm:$0xf]
        %v1449 = vld [vmem:[#allocation3 + $0x30] sm:$0xf]
        %v1450 = vld [vmem:[#allocation3 + $0x34] sm:$0xf]
        %v1451 = vld [vmem:[#allocation3 + $0x38] sm:$0xf]
        %v1452 = vld [vmem:[#allocation3 + $0x3c] sm:$0xf]
        %v1469 = vunpack.c.l.b16 %v1437
        %v1470 = vunpack.c.l.b16 %v1438
        %v1471 = vunpack.c.l.b16 %v1439
        %v1472 = vunpack.c.l.b16 %v1440
        %v1473 = vunpack.c.l.b16 %v1441
        %v1474 = vunpack.c.l.b16 %v1442
        %v1475 = vunpack.c.l.b16 %v1443
        %v1476 = vunpack.c.l.b16 %v1444
        %v1477 = vunpack.c.l.b16 %v1445
        %v1478 = vunpack.c.l.b16 %v1446
        %v1479 = vunpack.c.l.b16 %v1447
        %v1480 = vunpack.c.l.b16 %v1448
        %v1481 = vunpack.c.l.b16 %v1449
        %v1482 = vunpack.c.l.b16 %v1450
        %v1483 = vunpack.c.l.b16 %v1451
        %v1484 = vunpack.c.l.b16 %v1452
        %v1485 = vpack.c.b16 %v1470, %v1469
        %v1486 = vpack.c.b16 %v1472, %v1471
        %v1487 = vpack.c.b16 %v1474, %v1473
        %v1488 = vpack.c.b16 %v1476, %v1475
        %v1489 = vpack.c.b16 %v1478, %v1477
        %v1490 = vpack.c.b16 %v1480, %v1479
        %v1491 = vpack.c.b16 %v1482, %v1481
        %v1492 = vpack.c.b16 %v1484, %v1483
        %1501 = vmatpush.bf16.msra.mxu0 %v1492
        %1502 = vmatpush.bf16.msra.mxu0 %v1491
        %1503 = vmatpush.bf16.msra.mxu0 %v1490
        %1504 = vmatpush.bf16.msra.mxu0 %v1489
        %1505 = vmatpush.bf16.msra.mxu0 %v1488
        %1506 = vmatpush.bf16.msra.mxu0 %v1487
        %1507 = vmatpush.bf16.msra.mxu0 %v1486
        %1508 = vmatpush.bf16.msra.mxu0 %v1485
        %1509 = vmatmul.bf16.gmra.mxu0 %v1429
        %v1510 = vpop.f32.mrf.mxu0
        %v1511 = vadd.f32 0.0, %v1510
        %v1512 = vpop.f32.mrf.mxu0
        %v1513 = vadd.f32 0.0, %v1512
        %1514 = vmatmul.bf16.gmra.mxu0 %v1430
        %v1515 = vpop.f32.mrf.mxu0
        %v1516 = vadd.f32 0.0, %v1515
        %v1517 = vpop.f32.mrf.mxu0
        %v1518 = vadd.f32 0.0, %v1517
        %1519 = vmatmul.bf16.gmra.mxu0 %v1431
        %v1520 = vpop.f32.mrf.mxu0
        %v1521 = vadd.f32 0.0, %v1520
        %v1522 = vpop.f32.mrf.mxu0
        %v1523 = vadd.f32 0.0, %v1522
        %1524 = vmatmul.bf16.gmra.mxu0 %v1432
        %v1525 = vpop.f32.mrf.mxu0
        %v1526 = vadd.f32 0.0, %v1525
        %v1527 = vpop.f32.mrf.mxu0
        %v1528 = vadd.f32 0.0, %v1527
        %1529 = vmatmul.bf16.gmra.mxu0 %v1433
        %v1530 = vpop.f32.mrf.mxu0
        %v1531 = vadd.f32 0.0, %v1530
        %v1532 = vpop.f32.mrf.mxu0
        %v1533 = vadd.f32 0.0, %v1532
        %1534 = vmatmul.bf16.gmra.mxu0 %v1434
        %v1535 = vpop.f32.mrf.mxu0
        %v1536 = vadd.f32 0.0, %v1535
        %v1537 = vpop.f32.mrf.mxu0
        %v1538 = vadd.f32 0.0, %v1537
        %1539 = vmatmul.bf16.gmra.mxu0 %v1435
        %v1540 = vpop.f32.mrf.mxu0
        %v1541 = vadd.f32 0.0, %v1540
        %v1542 = vpop.f32.mrf.mxu0
        %v1543 = vadd.f32 0.0, %v1542
        %1544 = vmatmul.bf16.gmra.mxu0 %v1436
        %v1545 = vpop.f32.mrf.mxu0
        %v1546 = vadd.f32 0.0, %v1545
        %v1547 = vpop.f32.mrf.mxu0
        %v1548 = vadd.f32 0.0, %v1547
        %1549 = vdwg.mxu0
        %1550 = vst [vmem:[%s397] sm:$0xff] %v1511
        %1551 = vst [vmem:[%s397 + $0x8] sm:$0xff] %v1513
        %1552 = vst [vmem:[%s397 + $0x10] sm:$0xff] %v1516
        %1553 = vst [vmem:[%s397 + $0x18] sm:$0xff] %v1518
        %1554 = vst [vmem:[%s397 + $0x20] sm:$0xff] %v1521
        %1555 = vst [vmem:[%s397 + $0x28] sm:$0xff] %v1523
        %1556 = vst [vmem:[%s397 + $0x30] sm:$0xff] %v1526
        %1557 = vst [vmem:[%s397 + $0x38] sm:$0xff] %v1528
        %1558 = vst [vmem:[%s397 + $0x40] sm:$0xff] %v1531
        %1559 = vst [vmem:[%s397 + $0x48] sm:$0xff] %v1533
        %1560 = vst [vmem:[%s397 + $0x50] sm:$0xff] %v1536
        %1561 = vst [vmem:[%s397 + $0x58] sm:$0xff] %v1538
        %1562 = vst [vmem:[%s397 + $0x60] sm:$0xff] %v1541
        %1563 = vst [vmem:[%s397 + $0x68] sm:$0xff] %v1543
        %1564 = vst [vmem:[%s397 + $0x70] sm:$0xff] %v1546
        %1565 = vst [vmem:[%s397 + $0x78] sm:$0xff] %v1548
        %1566 = vst [vmem:[%s404] sm:$0xff] %v1203
        %1567 = vst [vmem:[%s404 + $0x8] sm:$0xff] %v1218
        %1568 = vst [vmem:[%s404 + $0x10] sm:$0xff] %v1233
        %1569 = vst [vmem:[%s404 + $0x18] sm:$0xff] %v1248
        %1570 = vst [vmem:[%s404 + $0x20] sm:$0xff] %v1263
        %1571 = vst [vmem:[%s404 + $0x28] sm:$0xff] %v1278
        %1572 = vst [vmem:[%s404 + $0x30] sm:$0xff] %v1293
        %1573 = vst [vmem:[%s404 + $0x38] sm:$0xff] %v1308
        %1574 = vst [vmem:[%s404 + $0x40] sm:$0xff] %v1323
        %1575 = vst [vmem:[%s404 + $0x48] sm:$0xff] %v1338
        %1576 = vst [vmem:[%s404 + $0x50] sm:$0xff] %v1353
        %1577 = vst [vmem:[%s404 + $0x58] sm:$0xff] %v1368
        %1578 = vst [vmem:[%s404 + $0x60] sm:$0xff] %v1383
        %1579 = vst [vmem:[%s404 + $0x68] sm:$0xff] %v1398
        %1580 = vst [vmem:[%s404 + $0x70] sm:$0xff] %v1413
        %1581 = vst [vmem:[%s404 + $0x78] sm:$0xff] %v1428
        %s1582 = sand.u32 %s192, 1
        %s1583 = scalar_lea.sflag [#allocation6], %s1582
        %s1584 = sand.u32 %s192, 1
        %s1585 = smul.addr %s1584, 128
        %s1586 = scalar_lea.vmem [#allocation12], %s1585
        %s1587 = sand.u32 %s220, 1
        %s1588 = scalar_lea.sflag [#allocation14], %s1587
        %s1589 = sand.u32 %s220, 1
        %s1590 = smul.addr %s1589, 128
        %s1591 = scalar_lea.vmem [#allocation13], %s1590
        // Predicated region
        $region65: #{tpu_custom_call.1} parent=43 // pred_check
          %p1592 = pneg %p202
        $region66: #{tpu_custom_call.1} parent=43 // pred_check_branch
          %1594 = sbr.rel (%p1592) target = $region68
        $region67: #{tpu_custom_call.1} parent=43 // pred_region
          %s1595 = smul.u32 16, %s37
          %1597 = vsyncadd %s1583, 0
          %s1598 = smul.addr %s36, 16
          %s1599 = sadd.s32 %s1595, %s1598
          %s1600 = smul.addr %s1599, 8
          %s1601 = scalar_lea.hbm %s6, %s1600
          %s1602 = sshll.u32 %s1586, 4
          %s1603 = int_to_ptr.vmem [resolvable:$true] %s1602
          %s1604 = sshll.u32 %s1601, 4
          %s1605 = int_to_ptr.hbm [resolvable:$true] %s1604
          %1610 = dma.vmem_to_hbm [thread:$0]  %s1603, 2048, %s1605, %s1583, 128, 128, 8
        $region68: #{tpu_custom_call.1} parent=43 // pred_fallthru
          _
        // Predicated region
        $region69: #{tpu_custom_call.1} parent=43 // pred_check
          %p1611 = pneg %p230
        $region70: #{tpu_custom_call.1} parent=43 // pred_check_branch
          %1613 = sbr.rel (%p1611) target = $region72
        $region71: #{tpu_custom_call.1} parent=43 // pred_region
          %s1614 = smul.u32 16, %s37
          %1616 = vsyncadd %s1588, 0
          %s1617 = smul.addr %s36, 16
          %s1618 = sadd.s32 %s1614, %s1617
          %s1619 = smul.addr %s1618, 8
          %s1620 = scalar_lea.hbm %s7, %s1619
          %s1621 = sshll.u32 %s1591, 4
          %s1622 = int_to_ptr.vmem [resolvable:$true] %s1621
          %s1623 = sshll.u32 %s1620, 4
          %s1624 = int_to_ptr.hbm [resolvable:$true] %s1623
          %1629 = dma.vmem_to_hbm [thread:$0]  %s1622, 2048, %s1624, %s1588, 128, 128, 8
        $region72: #{tpu_custom_call.1} parent=43 // pred_fallthru
          _
      $region44: #{tpu_custom_call.1} parent=5 // pred_fallthru
        _
      %p1630 = scmp.le.s32.totalorder 2, %s27
      // Predicated region
      $region73: #{tpu_custom_call.1} parent=5 // pred_check
        %p1631 = pneg %p1630
      $region74: #{tpu_custom_call.1} parent=5 // pred_check_branch
        %1633 = sbr.rel (%p1631) target = $region76
      $region75: #{tpu_custom_call.1} parent=5 // pred_region
        %s1634 = ssub.s32 %s27, 2
        // Predicated region
        $region77: #{tpu_custom_call.1} parent=75 // pred_check
          %p1635 = pneg %p208
        $region78: #{tpu_custom_call.1} parent=75 // pred_check_branch
          %1637 = sbr.rel (%p1635) target = $region80
        $region79: #{tpu_custom_call.1} parent=75 // pred_region
          %s1638 = sand.u32 %s193, 1
          %s1639 = scalar_lea.sflag [#allocation6], %s1638
          %s1640 = sand.u32 %s193, 1
          %s1641 = smul.addr %s1640, 128
          %s1642 = scalar_lea.vmem [#allocation12], %s1641
          %1644 = dma.done %s1639, 2048
        $region80: #{tpu_custom_call.1} parent=75 // pred_fallthru
          _
        // Predicated region
        $region81: #{tpu_custom_call.1} parent=75 // pred_check
          %p1645 = pneg %p236
        $region82: #{tpu_custom_call.1} parent=75 // pred_check_branch
          %1647 = sbr.rel (%p1645) target = $region84
        $region83: #{tpu_custom_call.1} parent=75 // pred_region
          %s1648 = sand.u32 %s221, 1
          %s1649 = scalar_lea.sflag [#allocation14], %s1648
          %s1650 = sand.u32 %s221, 1
          %s1651 = smul.addr %s1650, 128
          %s1652 = scalar_lea.vmem [#allocation13], %s1651
          %1654 = dma.done %s1649, 2048
        $region84: #{tpu_custom_call.1} parent=75 // pred_fallthru
          _
      $region76: #{tpu_custom_call.1} parent=5 // pred_fallthru
        _
    $region6: #{tpu_custom_call.1} parent=1 // loop_footer
      %s31 = sadd.s32 1, %s27
    $region7: #{tpu_custom_call.1} parent=1 // loop_footer_branch
      %26 = sbr.rel target = $region3
    $region8: #{tpu_custom_call.1} parent=1 // loop_exit
      _
    %1655 = vsyncpa [#allocation5], 1
    %s1656 = scalar_lea.sflag [#allocation5], 1
    %1657 = vsyncpa %s1656, 1
    %1658 = vsyncpa [#allocation8], 1
    %s1659 = scalar_lea.sflag [#allocation8], 1
    %1660 = vsyncpa %s1659, 1
    %1661 = vsyncpa [#allocation11], 1
    %1662 = vsyncpa [#allocation6], 1
    %s1663 = scalar_lea.sflag [#allocation6], 1
    %1664 = vsyncpa %s1663, 1
    %1665 = vsyncpa [#allocation14], 1
    %s1666 = scalar_lea.sflag [#allocation14], 1
    %1667 = vsyncpa %s1666, 1

</llo_original>
